<compile_context>
chip_gen: v7x
topology: tpu7x:2x2x1
jax: 0.10.0
libtpu: 0.0.40
codegen_flags: <defaults>
</compile_context>

<pallas_src>
import functools

import jax
import jax.numpy as jnp
from jax import lax
from jax.experimental import pallas as pl
from jax.experimental.pallas import tpu as pltpu


def _basic_block_kernel(*refs, B, H, W, Cin, Cout, identity):
    """Fused residual block for B batch elements, lane-folded (rows, W*C) layout.

    refs (projection): x_ref, w1_ref, w2_ref, ws_ref, out_ref
    refs (identity)  : x_ref, w1_ref, w2_ref, out_ref

    x_ref  : (B, H+4, (W+4)*Cin) bf16, input padded by 2 in H and W
    w1_ref : (9*(W+2)*Cin, (W+2)*Cout) bf16 block-diagonal conv1 slab
             (border output columns pre-zeroed in the wrapper)
    w2_ref : (9*W*Cout,     W*Cout)    bf16 block-diagonal conv2 slab
    ws_ref : (W*Cin,        W*Cout)    bf16 block-diagonal 1x1 shortcut slab
    out_ref: (B, H, W*Cout) f32
    """
    if identity:
        x_ref, w1_ref, w2_ref, out_ref = refs
        ws_ref = None
    else:
        x_ref, w1_ref, w2_ref, ws_ref, out_ref = refs

    He, We = H + 2, W + 2              # extended grid = zero-padded intermediate

    # ---- conv1 on the extended grid: one im2col matmul, M = B*He rows --------
    xs = [x_ref[b] for b in range(B)]                       # (H+4, (W+4)*Cin) bf16
    taps1 = []
    for xb in xs:
        taps1.append(jnp.concatenate(
            [xb[dh:dh + He, dw * Cin:(dw + We) * Cin]
             for dh in range(3) for dw in range(3)], axis=1))        # (He, 9*We*Cin)
    p1 = taps1[0] if B == 1 else jnp.concatenate(taps1, axis=0)      # (B*He, 9*We*Cin)
    h1 = jnp.dot(p1, w1_ref[...],
                 preferred_element_type=jnp.float32)                 # (B*He, We*Cout)

    # ReLU + zero only the top/bottom padding row of each image.  The w=0 / w=We-1
    # lane columns are already exact zeros (those weight columns are zero), so no
    # full 2-D lane mask is needed; h1 becomes exactly the zero-padded intermediate.
    r = lax.broadcasted_iota(jnp.int32, (B * He, 1), 0)
    border = (r == 0) | (r == He - 1)
    for b in range(1, B):
        border = border | (r == b * He) | (r == b * He + He - 1)
    h1b = jnp.where(border, 0.0, jnp.maximum(h1, 0.0)).astype(jnp.bfloat16)

    # ---- conv2: one im2col matmul, M = B*H rows -------------------------------
    taps2 = []
    for b in range(B):
        hb = h1b[b * He:(b + 1) * He]                                 # (He, We*Cout)
        taps2.append(jnp.concatenate(
            [hb[dh:dh + H, dw * Cout:(dw + W) * Cout]
             for dh in range(3) for dw in range(3)], axis=1))         # (H, 9*W*Cout)
    p2 = taps2[0] if B == 1 else jnp.concatenate(taps2, axis=0)       # (B*H, 9*W*Cout)
    acc = jnp.dot(p2, w2_ref[...],
                  preferred_element_type=jnp.float32)                 # (B*H, W*Cout)

    # ---- shortcut (trace-time specialized), also batch-folded -----------------
    xi = [xb[2:2 + H, 2 * Cin:(2 + W) * Cin] for xb in xs]            # (H, W*Cin) bf16
    x_int = xi[0] if B == 1 else jnp.concatenate(xi, axis=0)          # (B*H, W*Cin)
    if identity:
        acc = acc + x_int.astype(jnp.float32)
    else:
        acc = acc + jnp.dot(x_int, ws_ref[...],
                            preferred_element_type=jnp.float32)

    y = jnp.maximum(acc, 0.0)
    for b in range(B):                                                # lane-dense stores
        out_ref[b] = y[b * H:(b + 1) * H].astype(out_ref.dtype)


def _pick_batch_block(n, he, target_rows=256, min_split_rows=128):
    """Pick how many images to fold into one grid step (matmul M = B*(H+2))."""
    divisors = [b for b in range(1, n + 1) if n % b == 0]
    fits = [b for b in divisors if b * he <= target_rows] or [1]
    best = max(fits)
    # v7x has 2 TensorCores per chip: prefer >=2 grid steps when the MXU stays fed,
    # so the "parallel" grid axis can be sharded across cores.
    split = [b for b in fits if n // b >= 2 and b * he >= min_split_rows]
    if split:
        best = max(split)
    return best


def prepare_basic_block_weights(w1_oihw, w2_oihw, ws_oihw, H, W):
    """Build bf16 block-diagonal weight slabs ONCE per weight set (hoisted out of
    the per-forward path, as these einsums are O(9*W^2*C^2) work)."""
    Cout, Cin = int(w1_oihw.shape[0]), int(w1_oihw.shape[1])
    We = W + 2

    w1_t = jnp.transpose(w1_oihw, (2, 3, 1, 0)).reshape(9, Cin, Cout).astype(jnp.float32)
    w2_t = jnp.transpose(w2_oihw, (2, 3, 1, 0)).reshape(9, Cout, Cout).astype(jnp.float32)

    # Extended-grid eye with the w=0 / w=We-1 OUTPUT columns zeroed: conv1's border
    # lanes come out of the MXU as exact zeros, so no in-kernel lane mask is needed.
    col = jnp.arange(We)
    col_interior = ((col >= 1) & (col <= We - 2)).astype(jnp.float32)
    eye_e = jnp.eye(We, dtype=jnp.float32) * col_interior[None, :]
    eye_w = jnp.eye(W, dtype=jnp.float32)

    w1_bd = jnp.einsum("tio,wv->twivo", w1_t, eye_e).reshape(
        9 * We * Cin, We * Cout).astype(jnp.bfloat16)
    w2_bd = jnp.einsum("tio,wv->twivo", w2_t, eye_w).reshape(
        9 * W * Cout, W * Cout).astype(jnp.bfloat16)

    slabs = {"w1": w1_bd, "w2": w2_bd}
    if ws_oihw is not None:
        ws_t = jnp.transpose(ws_oihw, (2, 3, 1, 0)).reshape(Cin, Cout).astype(jnp.float32)
        slabs["ws"] = jnp.einsum("io,wv->wivo", ws_t, eye_w).reshape(
            W * Cin, W * Cout).astype(jnp.bfloat16)
    return slabs


@jax.jit
def basic_block_forward(x_nchw, slabs):
    """Residual BasicBlock forward (stride=1).

    x_nchw : (N, Cin, H, W) PyTorch-layout input
    slabs  : output of prepare_basic_block_weights()
    returns: (N, Cout, H, W)
    """
    N, Cin, H, W = x_nchw.shape
    He, We = H + 2, W + 2
    w1_bd, w2_bd = slabs["w1"], slabs["w2"]
    identity = "ws" not in slabs
    Cout = w1_bd.shape[1] // We
    if identity:
        assert Cin == Cout, "identity shortcut requires in_channels == out_channels"

    B = _pick_batch_block(N, He)
    G = N // B

    # NCHW -> NHWC (boundary-only), pad spatially by 2, fold (W, C) onto the lane
    # axis, and DMA as bf16 (halves HBM->VMEM input traffic; MXU operands are bf16).
    x_nhwc = jnp.transpose(x_nchw, (0, 2, 3, 1)).astype(jnp.bfloat16)
    x_pad = jnp.pad(x_nhwc, ((0, 0), (2, 2), (2, 2), (0, 0)))
    x_f = x_pad.reshape(N, H + 4, (W + 4) * Cin)

    kernel = functools.partial(_basic_block_kernel, B=B, H=H, W=W, Cin=Cin,
                               Cout=Cout, identity=identity)

    in_specs = [
        pl.BlockSpec((B, H + 4, (W + 4) * Cin), lambda g: (g, 0, 0)),
        pl.BlockSpec((9 * We * Cin, We * Cout), lambda g: (0, 0)),
        pl.BlockSpec((9 * W * Cout, W * Cout), lambda g: (0, 0)),
    ]
    args = [x_f, w1_bd, w2_bd]
    if not identity:
        in_specs.append(pl.BlockSpec((W * Cin, W * Cout), lambda g: (0, 0)))
        args.append(slabs["ws"])

    # Scaling guard: block-diagonal slabs grow as O(9*W^2*C^2); raise the scoped-VMEM
    # limit for mid-size shapes (demo shapes are a few hundred KiB and need nothing).
    weight_bytes = sum(a.size * a.dtype.itemsize for a in args[1:])
    compiler_kwargs = dict(dimension_semantics=("parallel",))
    if weight_bytes > 24 * (1 << 20):
        compiler_kwargs["vmem_limit_bytes"] = int(min(2 * weight_bytes + (16 << 20),
                                                      100 << 20))

    out_f = pl.pallas_call(
        kernel,
        out_shape=jax.ShapeDtypeStruct((N, H, W * Cout), jnp.float32),
        grid=(G,),
        in_specs=in_specs,
        out_specs=pl.BlockSpec((B, H, W * Cout), lambda g: (g, 0, 0)),
        compiler_params=pltpu.CompilerParams(**compiler_kwargs),
    )(*args)

    out_nhwc = out_f.reshape(N, H, W, Cout)
    return jnp.transpose(out_nhwc, (0, 3, 1, 2))   # back to NCHW


def basic_block_ref(x, w1, w2, ws, *, mimic_bf16=True):
    """Pure-JAX reference mirroring the PyTorch forward (stride=1).

    With mimic_bf16=True, operands are rounded to bf16 where the kernel rounds them
    (x at the DMA boundary, the ReLU'd intermediate, all weights), computed in f32.
    """
    def rnd(v):
        return v.astype(jnp.bfloat16).astype(jnp.float32) if mimic_bf16 else v

    dn = ("NCHW", "OIHW", "NCHW")
    xr = rnd(x)
    h = lax.conv_general_dilated(xr, rnd(w1), (1, 1), "SAME", dimension_numbers=dn)
    h = jnp.maximum(h, 0.0)
    y = lax.conv_general_dilated(rnd(h), rnd(w2), (1, 1), "SAME", dimension_numbers=dn)
    if ws is None:
        sc = xr
    else:
        sc = lax.conv_general_dilated(xr, rnd(ws), (1, 1), "VALID", dimension_numbers=dn)
    return jnp.maximum(y + sc, 0.0)


if __name__ == "__main__":
    key = jax.random.PRNGKey(0)
    kx, k1, k2, ks, kx2, k3, k4 = jax.random.split(key, 7)

    # --- Case 1: projection shortcut (in_channels != out_channels) -----------
    N, Cin, Cout, H, W = 2, 4, 8, 16, 16
    x = jax.random.normal(kx, (N, Cin, H, W), dtype=jnp.float32)
    w1 = 0.1 * jax.random.normal(k1, (Cout, Cin, 3, 3), dtype=jnp.float32)
    w2 = 0.1 * jax.random.normal(k2, (Cout, Cout, 3, 3), dtype=jnp.float32)
    ws = 0.1 * jax.random.normal(ks, (Cout, Cin, 1, 1), dtype=jnp.float32)

    slabs = prepare_basic_block_weights(w1, w2, ws, H, W)   # hoisted: once per weight set
    out = jax.block_until_ready(basic_block_forward(x, slabs))
    ref = basic_block_ref(x, w1, w2, ws)
    assert out.shape == (N, Cout, H, W)
    err = float(jnp.max(jnp.abs(out - ref)))
    assert jnp.allclose(out, ref, atol=2e-2, rtol=2e-2), f"proj max abs err = {err}"

    # --- Case 2: identity shortcut (in_channels == out_channels, stride=1) ---
    C = 8
    x2 = jax.random.normal(kx2, (N, C, H, W), dtype=jnp.float32)
    w1b = 0.1 * jax.random.normal(k3, (C, C, 3, 3), dtype=jnp.float32)
    w2b = 0.1 * jax.random.normal(k4, (C, C, 3, 3), dtype=jnp.float32)

    slabs2 = prepare_basic_block_weights(w1b, w2b, None, H, W)
    out2 = jax.block_until_ready(basic_block_forward(x2, slabs2))
    ref2 = basic_block_ref(x2, w1b, w2b, None)
    assert out2.shape == (N, C, H, W)
    err2 = float(jnp.max(jnp.abs(out2 - ref2)))
    assert jnp.allclose(out2, ref2, atol=2e-2, rtol=2e-2), f"id max abs err = {err2}"

    print("KERNEL_OK")
</pallas_src>

<mosaic_0001>
module attributes {stable_mosaic.version = 11 : i64} {
  func.func @_basic_block_kernel(%arg0: i32, %arg1: memref<2x20x80xbf16, #tpu.memory_space<vmem>>, %arg2: memref<648x144xbf16, #tpu.memory_space<vmem>>, %arg3: memref<1152x128xbf16, #tpu.memory_space<vmem>>, %arg4: memref<64x128xbf16, #tpu.memory_space<vmem>>, %arg5: memref<2x16x128xf32, #tpu.memory_space<vmem>>) attributes {dimension_semantics = [#tpu.dimension_semantics<parallel>], iteration_bounds = array<i64: 1>, scalar_prefetch = 0 : i64, scratch_operands = 0 : i64, tpu.core_type = #tpu.core_type<tc>, window_params = [{transform_indices = @transform_0, window_bounds = array<i64: 2, 20, 80>}, {pipeline_mode = #tpu.pipeline_mode<synchronous>, transform_indices = @transform_1, window_bounds = array<i64: 648, 144>}, {pipeline_mode = #tpu.pipeline_mode<synchronous>, transform_indices = @transform_2, window_bounds = array<i64: 1152, 128>}, {pipeline_mode = #tpu.pipeline_mode<synchronous>, transform_indices = @transform_3, window_bounds = array<i64: 64, 128>}, {transform_indices = @transform_4, window_bounds = array<i64: 2, 16, 128>}]} {
    %c0 = arith.constant 0 : index
    %c0_0 = arith.constant 0 : index
    %c0_1 = arith.constant 0 : index
    %0 = vector.load %arg1[%c0, %c0_0, %c0_1] : memref<2x20x80xbf16, #tpu.memory_space<vmem>>, vector<1x20x80xbf16>
    %1 = vector.shape_cast %0 : vector<1x20x80xbf16> to vector<20x80xbf16>
    %c1 = arith.constant 1 : index
    %c0_2 = arith.constant 0 : index
    %c0_3 = arith.constant 0 : index
    %2 = vector.load %arg1[%c1, %c0_2, %c0_3] : memref<2x20x80xbf16, #tpu.memory_space<vmem>>, vector<1x20x80xbf16>
    %3 = vector.shape_cast %2 : vector<1x20x80xbf16> to vector<20x80xbf16>
    %4 = vector.extract_strided_slice %1 {offsets = [0, 0], sizes = [18, 72], strides = [1, 1]} : vector<20x80xbf16> to vector<18x72xbf16>
    %5 = vector.extract_strided_slice %1 {offsets = [0, 4], sizes = [18, 72], strides = [1, 1]} : vector<20x80xbf16> to vector<18x72xbf16>
    %6 = vector.extract_strided_slice %1 {offsets = [0, 8], sizes = [18, 72], strides = [1, 1]} : vector<20x80xbf16> to vector<18x72xbf16>
    %7 = vector.extract_strided_slice %1 {offsets = [1, 0], sizes = [18, 72], strides = [1, 1]} : vector<20x80xbf16> to vector<18x72xbf16>
    %8 = vector.extract_strided_slice %1 {offsets = [1, 4], sizes = [18, 72], strides = [1, 1]} : vector<20x80xbf16> to vector<18x72xbf16>
    %9 = vector.extract_strided_slice %1 {offsets = [1, 8], sizes = [18, 72], strides = [1, 1]} : vector<20x80xbf16> to vector<18x72xbf16>
    %10 = vector.extract_strided_slice %1 {offsets = [2, 0], sizes = [18, 72], strides = [1, 1]} : vector<20x80xbf16> to vector<18x72xbf16>
    %11 = vector.extract_strided_slice %1 {offsets = [2, 4], sizes = [18, 72], strides = [1, 1]} : vector<20x80xbf16> to vector<18x72xbf16>
    %12 = vector.extract_strided_slice %1 {offsets = [2, 8], sizes = [18, 72], strides = [1, 1]} : vector<20x80xbf16> to vector<18x72xbf16>
    %13 = tpu.concatenate %4, %5, %6, %7, %8, %9, %10, %11, %12 in 1 : vector<18x72xbf16>, vector<18x72xbf16>, vector<18x72xbf16>, vector<18x72xbf16>, vector<18x72xbf16>, vector<18x72xbf16>, vector<18x72xbf16>, vector<18x72xbf16>, vector<18x72xbf16> -> vector<18x648xbf16>
    %14 = vector.extract_strided_slice %3 {offsets = [0, 0], sizes = [18, 72], strides = [1, 1]} : vector<20x80xbf16> to vector<18x72xbf16>
    %15 = vector.extract_strided_slice %3 {offsets = [0, 4], sizes = [18, 72], strides = [1, 1]} : vector<20x80xbf16> to vector<18x72xbf16>
    %16 = vector.extract_strided_slice %3 {offsets = [0, 8], sizes = [18, 72], strides = [1, 1]} : vector<20x80xbf16> to vector<18x72xbf16>
    %17 = vector.extract_strided_slice %3 {offsets = [1, 0], sizes = [18, 72], strides = [1, 1]} : vector<20x80xbf16> to vector<18x72xbf16>
    %18 = vector.extract_strided_slice %3 {offsets = [1, 4], sizes = [18, 72], strides = [1, 1]} : vector<20x80xbf16> to vector<18x72xbf16>
    %19 = vector.extract_strided_slice %3 {offsets = [1, 8], sizes = [18, 72], strides = [1, 1]} : vector<20x80xbf16> to vector<18x72xbf16>
    %20 = vector.extract_strided_slice %3 {offsets = [2, 0], sizes = [18, 72], strides = [1, 1]} : vector<20x80xbf16> to vector<18x72xbf16>
    %21 = vector.extract_strided_slice %3 {offsets = [2, 4], sizes = [18, 72], strides = [1, 1]} : vector<20x80xbf16> to vector<18x72xbf16>
    %22 = vector.extract_strided_slice %3 {offsets = [2, 8], sizes = [18, 72], strides = [1, 1]} : vector<20x80xbf16> to vector<18x72xbf16>
    %23 = tpu.concatenate %14, %15, %16, %17, %18, %19, %20, %21, %22 in 1 : vector<18x72xbf16>, vector<18x72xbf16>, vector<18x72xbf16>, vector<18x72xbf16>, vector<18x72xbf16>, vector<18x72xbf16>, vector<18x72xbf16>, vector<18x72xbf16>, vector<18x72xbf16> -> vector<18x648xbf16>
    %24 = tpu.concatenate %13, %23 in 0 : vector<18x648xbf16>, vector<18x648xbf16> -> vector<36x648xbf16>
    %c0_4 = arith.constant 0 : index
    %c0_5 = arith.constant 0 : index
    %25 = vector.load %arg2[%c0_4, %c0_5] : memref<648x144xbf16, #tpu.memory_space<vmem>>, vector<648x144xbf16>
    %cst = arith.constant dense<0.000000e+00> : vector<36x144xf32>
    %26 = tpu.matmul %24, %25, %cst {dimension_numbers = #tpu.dot_dimension_numbers<[1], [0], [0], [1], [0, 0, 1, 1], [], []>} : vector<36x648xbf16>, vector<648x144xbf16>, vector<36x144xf32> -> vector<36x144xf32>
    %27 = tpu.iota {dimensions = array<i32: 0>} : vector<36x1xi32>
    %c0_i32 = arith.constant 0 : i32
    %28 = vector.broadcast %c0_i32 : i32 to vector<36x1xi32>
    %29 = arith.cmpi eq, %27, %28 : vector<36x1xi32>
    %c17_i32 = arith.constant 17 : i32
    %30 = vector.broadcast %c17_i32 : i32 to vector<36x1xi32>
    %31 = arith.cmpi eq, %27, %30 : vector<36x1xi32>
    %32 = arith.ori %29, %31 : vector<36x1xi1>
    %c18_i32 = arith.constant 18 : i32
    %33 = vector.broadcast %c18_i32 : i32 to vector<36x1xi32>
    %34 = arith.cmpi eq, %27, %33 : vector<36x1xi32>
    %35 = arith.ori %32, %34 : vector<36x1xi1>
    %c35_i32 = arith.constant 35 : i32
    %36 = vector.broadcast %c35_i32 : i32 to vector<36x1xi32>
    %37 = arith.cmpi eq, %27, %36 : vector<36x1xi32>
    %38 = arith.ori %35, %37 : vector<36x1xi1>
    %cst_6 = arith.constant 0.000000e+00 : f32
    %39 = vector.broadcast %cst_6 : f32 to vector<36x144xf32>
    %40 = arith.maximumf %26, %39 : vector<36x144xf32>
    %cst_7 = arith.constant 0.000000e+00 : f32
    %41 = vector.shape_cast %38 : vector<36x1xi1> to vector<36x1xi1>
    %42 = vector.broadcast %41 : vector<36x1xi1> to vector<36x144xi1>
    %43 = vector.broadcast %cst_7 : f32 to vector<36x144xf32>
    %44 = arith.select %42, %43, %40 : vector<36x144xi1>, vector<36x144xf32>
    %45 = arith.truncf %44 : vector<36x144xf32> to vector<36x144xbf16>
    %46 = vector.extract_strided_slice %45 {offsets = [0, 0], sizes = [18, 144], strides = [1, 1]} : vector<36x144xbf16> to vector<18x144xbf16>
    %47 = vector.extract_strided_slice %46 {offsets = [0, 0], sizes = [16, 128], strides = [1, 1]} : vector<18x144xbf16> to vector<16x128xbf16>
    %48 = vector.extract_strided_slice %46 {offsets = [0, 8], sizes = [16, 128], strides = [1, 1]} : vector<18x144xbf16> to vector<16x128xbf16>
    %49 = vector.extract_strided_slice %46 {offsets = [0, 16], sizes = [16, 128], strides = [1, 1]} : vector<18x144xbf16> to vector<16x128xbf16>
    %50 = vector.extract_strided_slice %46 {offsets = [1, 0], sizes = [16, 128], strides = [1, 1]} : vector<18x144xbf16> to vector<16x128xbf16>
    %51 = vector.extract_strided_slice %46 {offsets = [1, 8], sizes = [16, 128], strides = [1, 1]} : vector<18x144xbf16> to vector<16x128xbf16>
    %52 = vector.extract_strided_slice %46 {offsets = [1, 16], sizes = [16, 128], strides = [1, 1]} : vector<18x144xbf16> to vector<16x128xbf16>
    %53 = vector.extract_strided_slice %46 {offsets = [2, 0], sizes = [16, 128], strides = [1, 1]} : vector<18x144xbf16> to vector<16x128xbf16>
    %54 = vector.extract_strided_slice %46 {offsets = [2, 8], sizes = [16, 128], strides = [1, 1]} : vector<18x144xbf16> to vector<16x128xbf16>
    %55 = vector.extract_strided_slice %46 {offsets = [2, 16], sizes = [16, 128], strides = [1, 1]} : vector<18x144xbf16> to vector<16x128xbf16>
    %56 = tpu.concatenate %47, %48, %49, %50, %51, %52, %53, %54, %55 in 1 : vector<16x128xbf16>, vector<16x128xbf16>, vector<16x128xbf16>, vector<16x128xbf16>, vector<16x128xbf16>, vector<16x128xbf16>, vector<16x128xbf16>, vector<16x128xbf16>, vector<16x128xbf16> -> vector<16x1152xbf16>
    %57 = vector.extract_strided_slice %45 {offsets = [18, 0], sizes = [18, 144], strides = [1, 1]} : vector<36x144xbf16> to vector<18x144xbf16>
    %58 = vector.extract_strided_slice %57 {offsets = [0, 0], sizes = [16, 128], strides = [1, 1]} : vector<18x144xbf16> to vector<16x128xbf16>
    %59 = vector.extract_strided_slice %57 {offsets = [0, 8], sizes = [16, 128], strides = [1, 1]} : vector<18x144xbf16> to vector<16x128xbf16>
    %60 = vector.extract_strided_slice %57 {offsets = [0, 16], sizes = [16, 128], strides = [1, 1]} : vector<18x144xbf16> to vector<16x128xbf16>
    %61 = vector.extract_strided_slice %57 {offsets = [1, 0], sizes = [16, 128], strides = [1, 1]} : vector<18x144xbf16> to vector<16x128xbf16>
    %62 = vector.extract_strided_slice %57 {offsets = [1, 8], sizes = [16, 128], strides = [1, 1]} : vector<18x144xbf16> to vector<16x128xbf16>
    %63 = vector.extract_strided_slice %57 {offsets = [1, 16], sizes = [16, 128], strides = [1, 1]} : vector<18x144xbf16> to vector<16x128xbf16>
    %64 = vector.extract_strided_slice %57 {offsets = [2, 0], sizes = [16, 128], strides = [1, 1]} : vector<18x144xbf16> to vector<16x128xbf16>
    %65 = vector.extract_strided_slice %57 {offsets = [2, 8], sizes = [16, 128], strides = [1, 1]} : vector<18x144xbf16> to vector<16x128xbf16>
    %66 = vector.extract_strided_slice %57 {offsets = [2, 16], sizes = [16, 128], strides = [1, 1]} : vector<18x144xbf16> to vector<16x128xbf16>
    %67 = tpu.concatenate %58, %59, %60, %61, %62, %63, %64, %65, %66 in 1 : vector<16x128xbf16>, vector<16x128xbf16>, vector<16x128xbf16>, vector<16x128xbf16>, vector<16x128xbf16>, vector<16x128xbf16>, vector<16x128xbf16>, vector<16x128xbf16>, vector<16x128xbf16> -> vector<16x1152xbf16>
    %68 = tpu.concatenate %56, %67 in 0 : vector<16x1152xbf16>, vector<16x1152xbf16> -> vector<32x1152xbf16>
    %c0_8 = arith.constant 0 : index
    %c0_9 = arith.constant 0 : index
    %69 = vector.load %arg3[%c0_8, %c0_9] : memref<1152x128xbf16, #tpu.memory_space<vmem>>, vector<1152x128xbf16>
    %cst_10 = arith.constant dense<0.000000e+00> : vector<32x128xf32>
    %70 = tpu.matmul %68, %69, %cst_10 {dimension_numbers = #tpu.dot_dimension_numbers<[1], [0], [0], [1], [0, 0, 1, 1], [], []>} : vector<32x1152xbf16>, vector<1152x128xbf16>, vector<32x128xf32> -> vector<32x128xf32>
    %71 = vector.extract_strided_slice %1 {offsets = [2, 8], sizes = [16, 64], strides = [1, 1]} : vector<20x80xbf16> to vector<16x64xbf16>
    %72 = vector.extract_strided_slice %3 {offsets = [2, 8], sizes = [16, 64], strides = [1, 1]} : vector<20x80xbf16> to vector<16x64xbf16>
    %73 = tpu.concatenate %71, %72 in 0 : vector<16x64xbf16>, vector<16x64xbf16> -> vector<32x64xbf16>
    %c0_11 = arith.constant 0 : index
    %c0_12 = arith.constant 0 : index
    %74 = vector.load %arg4[%c0_11, %c0_12] : memref<64x128xbf16, #tpu.memory_space<vmem>>, vector<64x128xbf16>
    %cst_13 = arith.constant dense<0.000000e+00> : vector<32x128xf32>
    %75 = tpu.matmul %73, %74, %cst_13 {dimension_numbers = #tpu.dot_dimension_numbers<[1], [0], [0], [1], [0, 0, 1, 1], [], []>} : vector<32x64xbf16>, vector<64x128xbf16>, vector<32x128xf32> -> vector<32x128xf32>
    %76 = arith.addf %70, %75 : vector<32x128xf32>
    %cst_14 = arith.constant 0.000000e+00 : f32
    %77 = vector.broadcast %cst_14 : f32 to vector<32x128xf32>
    %78 = arith.maximumf %76, %77 : vector<32x128xf32>
    %79 = vector.extract_strided_slice %78 {offsets = [0, 0], sizes = [16, 128], strides = [1, 1]} : vector<32x128xf32> to vector<16x128xf32>
    %c0_15 = arith.constant 0 : index
    %c0_16 = arith.constant 0 : index
    %c0_17 = arith.constant 0 : index
    %80 = vector.load %arg5[%c0_15, %c0_16, %c0_17] : memref<2x16x128xf32, #tpu.memory_space<vmem>>, vector<1x16x128xf32>
    %81 = vector.shape_cast %80 : vector<1x16x128xf32> to vector<16x128xf32>
    %82 = vector.shape_cast %79 : vector<16x128xf32> to vector<1x16x128xf32>
    tpu.vector_store %arg5[%c0_15, %c0_16, %c0_17], %82 {strides = array<i32>} : memref<2x16x128xf32, #tpu.memory_space<vmem>>, vector<1x16x128xf32>,
    %83 = vector.extract_strided_slice %78 {offsets = [16, 0], sizes = [16, 128], strides = [1, 1]} : vector<32x128xf32> to vector<16x128xf32>
    %c1_18 = arith.constant 1 : index
    %c0_19 = arith.constant 0 : index
    %c0_20 = arith.constant 0 : index
    %84 = vector.load %arg5[%c1_18, %c0_19, %c0_20] : memref<2x16x128xf32, #tpu.memory_space<vmem>>, vector<1x16x128xf32>
    %85 = vector.shape_cast %84 : vector<1x16x128xf32> to vector<16x128xf32>
    %86 = vector.shape_cast %83 : vector<16x128xf32> to vector<1x16x128xf32>
    tpu.vector_store %arg5[%c1_18, %c0_19, %c0_20], %86 {strides = array<i32>} : memref<2x16x128xf32, #tpu.memory_space<vmem>>, vector<1x16x128xf32>,
    return
  }
  func.func @transform_0(%arg0: i32) -> (i32, i32, i32) {
    %c0_i32 = arith.constant 0 : i32
    %c0_i32_0 = arith.constant 0 : i32
    %c0_i32_1 = arith.constant 0 : i32
    return %arg0, %c0_i32, %c0_i32_0 : i32, i32, i32
  }
  func.func @transform_1(%arg0: i32) -> (i32, i32) {
    %c0_i32 = arith.constant 0 : i32
    %c0_i32_0 = arith.constant 0 : i32
    %c0_i32_1 = arith.constant 0 : i32
    return %c0_i32, %c0_i32_0 : i32, i32
  }
  func.func @transform_2(%arg0: i32) -> (i32, i32) {
    %c0_i32 = arith.constant 0 : i32
    %c0_i32_0 = arith.constant 0 : i32
    %c0_i32_1 = arith.constant 0 : i32
    return %c0_i32, %c0_i32_0 : i32, i32
  }
  func.func @transform_3(%arg0: i32) -> (i32, i32) {
    %c0_i32 = arith.constant 0 : i32
    %c0_i32_0 = arith.constant 0 : i32
    %c0_i32_1 = arith.constant 0 : i32
    return %c0_i32, %c0_i32_0 : i32, i32
  }
  func.func @transform_4(%arg0: i32) -> (i32, i32, i32) {
    %c0_i32 = arith.constant 0 : i32
    %c0_i32_0 = arith.constant 0 : i32
    %c0_i32_1 = arith.constant 0 : i32
    return %arg0, %c0_i32, %c0_i32_0 : i32, i32, i32
  }
}

</mosaic_0001>

<llo_original>
// kernel: basic_block_forward.1
$region0: #{basic_block_forward.1}
  #allocation0 [shape = 'u32[]', space=smem, size = 0x4, offset = 0x4, fixed_abs, tag = 'smem constant byte address 0x4 - core index']
  #allocation1 [shape = 'u32[144,128]{1,0:T(1,128)}', space=vmem, size = 0x12000, scoped, tag = 'internal scratch']
  %s0 = inlined_call_operand.vmem [shape: bf16[2,20,80], index: 0, kind: input, shape index: {}]
  %s1 = inlined_call_operand.vmem [shape: bf16[648,144], index: 1, kind: input, shape index: {}]
  %s2 = inlined_call_operand.vmem [shape: bf16[1152,128], index: 2, kind: input, shape index: {}]
  %s3 = inlined_call_operand.vmem [shape: bf16[64,128], index: 3, kind: input, shape index: {}]
  %s4 = inlined_call_operand.vmem [shape: f32[2,16,128], index: 4, kind: output, shape index: {}]
  %s5 = sld [smem:[#allocation0]]
  $region26: #{basic_block_forward.1} parent=0
    _
  %s7 = ssub.s32 1, %s5
  %s8 = scalar_select 0, %s7, %s5
  // Predicated region
  $region2: #{basic_block_forward.1} parent=0 // pred_check
    _
  $region3: #{basic_block_forward.1} parent=0 // pred_check_branch
    %10 = sbr.rel (0) target = $region5
  $region4: #{basic_block_forward.1} parent=0 // pred_region
    _
  $region5: #{basic_block_forward.1} parent=0 // pred_fallthru
    _
  // Predicated region
  $region6: #{basic_block_forward.1} parent=0 // pred_check
    _
  $region7: #{basic_block_forward.1} parent=0 // pred_check_branch
    %12 = sbr.rel (0) target = $region9
  $region8: #{basic_block_forward.1} parent=0 // pred_region
    _
  $region9: #{basic_block_forward.1} parent=0 // pred_fallthru
    _
  // Predicated region
  $region10: #{basic_block_forward.1} parent=0 // pred_check
    _
  $region11: #{basic_block_forward.1} parent=0 // pred_check_branch
    %14 = sbr.rel (0) target = $region13
  $region12: #{basic_block_forward.1} parent=0 // pred_region
    _
  $region13: #{basic_block_forward.1} parent=0 // pred_fallthru
    _
  // Predicated region
  $region14: #{basic_block_forward.1} parent=0 // pred_check
    _
  $region15: #{basic_block_forward.1} parent=0 // pred_check_branch
    %16 = sbr.rel (0) target = $region17
  $region16: #{basic_block_forward.1} parent=0 // pred_region
    _
  $region17: #{basic_block_forward.1} parent=0 // pred_fallthru
    _
  %v18 = vld [vmem:[%s0] sm:$0xf]
  %v19 = vld [vmem:[%s0 + $0x4] sm:$0xf]
  %v20 = vld [vmem:[%s0 + $0x8] sm:$0x3]
  %s21 = scalar_lea.vmem %s0, 12
  %v22 = vld [vmem:[%s21] sm:$0xf]
  %v23 = vld [vmem:[%s21 + $0x4] sm:$0xf]
  %v24 = vld [vmem:[%s21 + $0x8] sm:$0x3]
  %v28 = vunpack.c.l.b16 %v18
  %v29 = vunpack.c.l.b16 %v19
  %v30 = vunpack.c.l.b16 %v20
  %v31 = vpack.c.b16 %v29, %v28
  %v32 = vpack.c.b16 %v30, %v30
  %33 = vrot.lane.b32.xlu0 %v31, 68
  %v34 = vpop.permute.xlu0 %33
  %35 = vrot.lane.b32.xlu0 %v32, 68
  %v36 = vpop.permute.xlu0 %35
  %37 = vrot.lane.b32.xlu0 %v31, 8
  %v38 = vpop.permute.xlu0 %37
  %39 = vrot.lane.b32.xlu0 %v32, 8
  %v40 = vpop.permute.xlu0 %39
  %vm41 = vsmask.f32 7424
  %v43 = vshrl.u32 %v31, 16
  %v45 = vshll.u32 %v31, 16
  %v47 = vrot.slane %v45, 1
  %v48 = vor.u32 %v43, %v47
  %v50 = vshll.u32 %v32, 16
  %v52 = vrot.slane %v50, 1
  %v53 = vsel %vm41, %v48, %v52
  %v54 = vshrl.u32 %v32, 16
  %v56 = vor.u32 %v54, %v52
  %57 = vrot.lane.b32.xlu0 %v53, 88
  %v58 = vpop.permute.xlu0 %57
  %59 = vrot.lane.b32.xlu0 %v56, 88
  %v60 = vpop.permute.xlu0 %59
  %61 = vrot.lane.b32.xlu0 %v53, 28
  %v62 = vpop.permute.xlu0 %61
  %63 = vrot.lane.b32.xlu0 %v56, 28
  %v64 = vpop.permute.xlu0 %63
  %65 = vrot.lane.b32.xlu0 %v53, 96
  %v66 = vpop.permute.xlu0 %65
  %67 = vrot.lane.b32.xlu0 %v56, 96
  %v68 = vpop.permute.xlu0 %67
  %vm69 = vcmask 1046528
  %v70 = vrot.slane %v31, 1
  %v71 = vrot.slane %v32, 1
  %v72 = vsel %vm69, %v70, %v71
  %73 = vrot.lane.b32.xlu0 %v72, 48
  %v74 = vpop.permute.xlu0 %73
  %75 = vrot.lane.b32.xlu0 %v71, 48
  %v76 = vpop.permute.xlu0 %75
  %77 = vrot.lane.b32.xlu0 %v72, 116
  %v78 = vpop.permute.xlu0 %77
  %79 = vrot.lane.b32.xlu0 %v71, 116
  %v80 = vpop.permute.xlu0 %79
  %81 = vrot.lane.b32.xlu0 %v72, 56
  %v82 = vpop.permute.xlu0 %81
  %83 = vrot.lane.b32.xlu0 %v71, 56
  %v84 = vpop.permute.xlu0 %83
  %vm85 = vcmask 588800
  %v87 = vsel %vm85, %v31, %v34
  %v90 = vsel %vm85, %v32, %v36
  %vm91 = vcmask 130048
  %v93 = vsel %vm91, %v34, %v38
  %v95 = vsel %vm91, %v36, %v40
  %vm96 = vcmask 719872
  %v98 = vsel %vm96, %v93, %v58
  %v101 = vsel %vm96, %v95, %v60
  %vm102 = vcmask 261120
  %v104 = vsel %vm102, %v58, %v62
  %v106 = vsel %vm102, %v60, %v64
  %vm107 = vcmask 850944
  %v109 = vsel %vm107, %v104, %v66
  %v112 = vsel %vm107, %v106, %v68
  %vm113 = vcmask 392192
  %v115 = vsel %vm113, %v66, %v74
  %v117 = vsel %vm113, %v68, %v76
  %vm118 = vcmask 982016
  %v120 = vsel %vm118, %v115, %v78
  %v123 = vsel %vm118, %v117, %v80
  %vm124 = vcmask 523264
  %v126 = vsel %vm124, %v78, %v82
  %v129 = vsel %vm124, %v80, %v84
  %v133 = vunpack.c.l.b16 %v22
  %v134 = vunpack.c.l.b16 %v23
  %v135 = vunpack.c.l.b16 %v24
  %v136 = vpack.c.b16 %v134, %v133
  %v137 = vpack.c.b16 %v135, %v135
  %138 = vrot.lane.b32.xlu0 %v136, 68
  %v139 = vpop.permute.xlu0 %138
  %140 = vrot.lane.b32.xlu0 %v137, 68
  %v141 = vpop.permute.xlu0 %140
  %142 = vrot.lane.b32.xlu0 %v136, 8
  %v143 = vpop.permute.xlu0 %142
  %144 = vrot.lane.b32.xlu0 %v137, 8
  %v145 = vpop.permute.xlu0 %144
  %v147 = vshrl.u32 %v136, 16
  %v149 = vshll.u32 %v136, 16
  %v151 = vrot.slane %v149, 1
  %v152 = vor.u32 %v147, %v151
  %v154 = vshll.u32 %v137, 16
  %v156 = vrot.slane %v154, 1
  %v157 = vsel %vm41, %v152, %v156
  %v158 = vshrl.u32 %v137, 16
  %v160 = vor.u32 %v158, %v156
  %161 = vrot.lane.b32.xlu0 %v157, 88
  %v162 = vpop.permute.xlu0 %161
  %163 = vrot.lane.b32.xlu0 %v160, 88
  %v164 = vpop.permute.xlu0 %163
  %165 = vrot.lane.b32.xlu0 %v157, 28
  %v166 = vpop.permute.xlu0 %165
  %167 = vrot.lane.b32.xlu0 %v160, 28
  %v168 = vpop.permute.xlu0 %167
  %169 = vrot.lane.b32.xlu0 %v157, 96
  %v170 = vpop.permute.xlu0 %169
  %171 = vrot.lane.b32.xlu0 %v160, 96
  %v172 = vpop.permute.xlu0 %171
  %v173 = vrot.slane %v136, 1
  %v174 = vrot.slane %v137, 1
  %v175 = vsel %vm69, %v173, %v174
  %176 = vrot.lane.b32.xlu0 %v175, 48
  %v177 = vpop.permute.xlu0 %176
  %178 = vrot.lane.b32.xlu0 %v174, 48
  %v179 = vpop.permute.xlu0 %178
  %180 = vrot.lane.b32.xlu0 %v175, 116
  %v181 = vpop.permute.xlu0 %180
  %182 = vrot.lane.b32.xlu0 %v174, 116
  %v183 = vpop.permute.xlu0 %182
  %184 = vrot.lane.b32.xlu0 %v175, 56
  %v185 = vpop.permute.xlu0 %184
  %186 = vrot.lane.b32.xlu0 %v174, 56
  %v187 = vpop.permute.xlu0 %186
  %v189 = vsel %vm85, %v136, %v139
  %v191 = vsel %vm85, %v137, %v141
  %v193 = vsel %vm91, %v139, %v143
  %v195 = vsel %vm91, %v141, %v145
  %v197 = vsel %vm96, %v193, %v162
  %v199 = vsel %vm96, %v195, %v164
  %v201 = vsel %vm102, %v162, %v166
  %v203 = vsel %vm102, %v164, %v168
  %v205 = vsel %vm107, %v201, %v170
  %v207 = vsel %vm107, %v203, %v172
  %v209 = vsel %vm113, %v170, %v177
  %v211 = vsel %vm113, %v172, %v179
  %v213 = vsel %vm118, %v209, %v181
  %v215 = vsel %vm118, %v211, %v183
  %v217 = vsel %vm124, %v181, %v185
  %v219 = vsel %vm124, %v183, %v187
  %vm230 = vcmask 1040384
  %v231 = vrot.slane %v189, 7
  %v232 = vrot.slane %v197, 7
  %v233 = vrot.slane %v205, 7
  %v234 = vrot.slane %v213, 7
  %v235 = vrot.slane %v217, 7
  %v236 = vrot.slane %v185, 7
  %v237 = vrot.slane %v191, 7
  %v238 = vsel %vm230, %v231, %v237
  %v239 = vrot.slane %v199, 7
  %v240 = vsel %vm230, %v232, %v239
  %v241 = vrot.slane %v207, 7
  %v242 = vsel %vm230, %v233, %v241
  %v243 = vrot.slane %v215, 7
  %v244 = vsel %vm230, %v234, %v243
  %v245 = vrot.slane %v219, 7
  %v246 = vsel %vm230, %v235, %v245
  %v247 = vrot.slane %v187, 7
  %v248 = vsel %vm230, %v236, %v247
  %vm254 = vcmask 1040384
  %v256 = vsel %vm254, %v90, %v231
  %v259 = vsel %vm254, %v101, %v232
  %v262 = vsel %vm254, %v112, %v233
  %v265 = vsel %vm254, %v123, %v234
  %v268 = vsel %vm254, %v129, %v235
  %v271 = vsel %vm254, %v84, %v236
  %v272 = vld [vmem:[%s1] sm:$0xff]
  %v273 = vld [vmem:[%s1 + $0x8] sm:$0xff]
  %v274 = vld [vmem:[%s1 + $0x10] sm:$0xff]
  %v275 = vld [vmem:[%s1 + $0x18] sm:$0xff]
  %v276 = vld [vmem:[%s1 + $0x20] sm:$0xff]
  %v277 = vld [vmem:[%s1 + $0x28] sm:$0xff]
  %v278 = vld [vmem:[%s1 + $0x30] sm:$0xff]
  %v279 = vld [vmem:[%s1 + $0x38] sm:$0xff]
  %v280 = vld [vmem:[%s1 + $0x40] sm:$0xff]
  %v281 = vld [vmem:[%s1 + $0x48] sm:$0xff]
  %v282 = vld [vmem:[%s1 + $0x50] sm:$0xff]
  %v283 = vld [vmem:[%s1 + $0x58] sm:$0xff]
  %v284 = vld [vmem:[%s1 + $0x60] sm:$0xff]
  %v285 = vld [vmem:[%s1 + $0x68] sm:$0xff]
  %v286 = vld [vmem:[%s1 + $0x70] sm:$0xff]
  %v287 = vld [vmem:[%s1 + $0x78] sm:$0xff]
  %v288 = vld [vmem:[%s1 + $0x80] sm:$0xff]
  %v289 = vld [vmem:[%s1 + $0x88] sm:$0xff]
  %v290 = vld [vmem:[%s1 + $0x90] sm:$0xff]
  %v291 = vld [vmem:[%s1 + $0x98] sm:$0xff]
  %v292 = vld [vmem:[%s1 + $0xa0] sm:$0xff]
  %v293 = vld [vmem:[%s1 + $0xa8] sm:$0xff]
  %v294 = vld [vmem:[%s1 + $0xb0] sm:$0xff]
  %v295 = vld [vmem:[%s1 + $0xb8] sm:$0xff]
  %v296 = vld [vmem:[%s1 + $0xc0] sm:$0xff]
  %v297 = vld [vmem:[%s1 + $0xc8] sm:$0xff]
  %v298 = vld [vmem:[%s1 + $0xd0] sm:$0xff]
  %v299 = vld [vmem:[%s1 + $0xd8] sm:$0xff]
  %v300 = vld [vmem:[%s1 + $0xe0] sm:$0xff]
  %v301 = vld [vmem:[%s1 + $0xe8] sm:$0xff]
  %v302 = vld [vmem:[%s1 + $0xf0] sm:$0xff]
  %v303 = vld [vmem:[%s1 + $0xf8] sm:$0xff]
  %v304 = vld [vmem:[%s1 + $0x100] sm:$0xff]
  %v305 = vld [vmem:[%s1 + $0x108] sm:$0xff]
  %v306 = vld [vmem:[%s1 + $0x110] sm:$0xff]
  %v307 = vld [vmem:[%s1 + $0x118] sm:$0xff]
  %v308 = vld [vmem:[%s1 + $0x120] sm:$0xff]
  %v309 = vld [vmem:[%s1 + $0x128] sm:$0xff]
  %v310 = vld [vmem:[%s1 + $0x130] sm:$0xff]
  %v311 = vld [vmem:[%s1 + $0x138] sm:$0xff]
  %v312 = vld [vmem:[%s1 + $0x140] sm:$0xff]
  %v313 = vld [vmem:[%s1 + $0x148] sm:$0xff]
  %v314 = vld [vmem:[%s1 + $0x150] sm:$0xff]
  %v315 = vld [vmem:[%s1 + $0x158] sm:$0xff]
  %v316 = vld [vmem:[%s1 + $0x160] sm:$0xff]
  %v317 = vld [vmem:[%s1 + $0x168] sm:$0xff]
  %v318 = vld [vmem:[%s1 + $0x170] sm:$0xff]
  %v319 = vld [vmem:[%s1 + $0x178] sm:$0xff]
  %v320 = vld [vmem:[%s1 + $0x180] sm:$0xff]
  %v321 = vld [vmem:[%s1 + $0x188] sm:$0xff]
  %v322 = vld [vmem:[%s1 + $0x190] sm:$0xff]
  %v323 = vld [vmem:[%s1 + $0x198] sm:$0xff]
  %v324 = vld [vmem:[%s1 + $0x1a0] sm:$0xff]
  %v325 = vld [vmem:[%s1 + $0x1a8] sm:$0xff]
  %v326 = vld [vmem:[%s1 + $0x1b0] sm:$0xff]
  %v327 = vld [vmem:[%s1 + $0x1b8] sm:$0xff]
  %v328 = vld [vmem:[%s1 + $0x1c0] sm:$0xff]
  %v329 = vld [vmem:[%s1 + $0x1c8] sm:$0xff]
  %v330 = vld [vmem:[%s1 + $0x1d0] sm:$0xff]
  %v331 = vld [vmem:[%s1 + $0x1d8] sm:$0xff]
  %v332 = vld [vmem:[%s1 + $0x1e0] sm:$0xff]
  %v333 = vld [vmem:[%s1 + $0x1e8] sm:$0xff]
  %v334 = vld [vmem:[%s1 + $0x1f0] sm:$0xff]
  %v335 = vld [vmem:[%s1 + $0x1f8] sm:$0xff]
  %v336 = vld [vmem:[%s1 + $0x200] sm:$0xff]
  %v337 = vld [vmem:[%s1 + $0x208] sm:$0xff]
  %v338 = vld [vmem:[%s1 + $0x210] sm:$0xff]
  %v339 = vld [vmem:[%s1 + $0x218] sm:$0xff]
  %v340 = vld [vmem:[%s1 + $0x220] sm:$0xff]
  %v341 = vld [vmem:[%s1 + $0x228] sm:$0xff]
  %v342 = vld [vmem:[%s1 + $0x230] sm:$0xff]
  %v343 = vld [vmem:[%s1 + $0x238] sm:$0xff]
  %v344 = vld [vmem:[%s1 + $0x240] sm:$0xff]
  %v345 = vld [vmem:[%s1 + $0x248] sm:$0xff]
  %v346 = vld [vmem:[%s1 + $0x250] sm:$0xff]
  %v347 = vld [vmem:[%s1 + $0x258] sm:$0xff]
  %v348 = vld [vmem:[%s1 + $0x260] sm:$0xff]
  %v349 = vld [vmem:[%s1 + $0x268] sm:$0xff]
  %v350 = vld [vmem:[%s1 + $0x270] sm:$0xff]
  %v351 = vld [vmem:[%s1 + $0x278] sm:$0xff]
  %v352 = vld [vmem:[%s1 + $0x280] sm:$0xff]
  %v434 = vunpack.c.l.b16 %v272
  %v435 = vunpack.c.h.b16 %v272
  %v436 = vunpack.c.l.b16 %v273
  %v437 = vunpack.c.h.b16 %v273
  %v438 = vunpack.c.l.b16 %v274
  %v439 = vunpack.c.h.b16 %v274
  %v440 = vunpack.c.l.b16 %v275
  %v441 = vunpack.c.h.b16 %v275
  %v442 = vunpack.c.l.b16 %v276
  %v443 = vunpack.c.h.b16 %v276
  %v444 = vunpack.c.l.b16 %v277
  %v445 = vunpack.c.h.b16 %v277
  %v446 = vunpack.c.l.b16 %v278
  %v447 = vunpack.c.h.b16 %v278
  %v448 = vunpack.c.l.b16 %v279
  %v449 = vunpack.c.h.b16 %v279
  %v450 = vunpack.c.l.b16 %v280
  %v451 = vunpack.c.h.b16 %v280
  %v452 = vunpack.c.l.b16 %v281
  %v453 = vunpack.c.h.b16 %v281
  %v454 = vunpack.c.l.b16 %v282
  %v455 = vunpack.c.h.b16 %v282
  %v456 = vunpack.c.l.b16 %v283
  %v457 = vunpack.c.h.b16 %v283
  %v458 = vunpack.c.l.b16 %v284
  %v459 = vunpack.c.h.b16 %v284
  %v460 = vunpack.c.l.b16 %v285
  %v461 = vunpack.c.h.b16 %v285
  %v462 = vunpack.c.l.b16 %v286
  %v463 = vunpack.c.h.b16 %v286
  %v464 = vunpack.c.l.b16 %v287
  %v465 = vunpack.c.h.b16 %v287
  %v466 = vunpack.c.l.b16 %v288
  %v467 = vunpack.c.h.b16 %v288
  %v468 = vunpack.c.l.b16 %v289
  %v469 = vunpack.c.h.b16 %v289
  %v470 = vunpack.c.l.b16 %v290
  %v471 = vunpack.c.h.b16 %v290
  %v472 = vunpack.c.l.b16 %v291
  %v473 = vunpack.c.h.b16 %v291
  %v474 = vunpack.c.l.b16 %v292
  %v475 = vunpack.c.h.b16 %v292
  %v476 = vunpack.c.l.b16 %v293
  %v477 = vunpack.c.h.b16 %v293
  %v478 = vunpack.c.l.b16 %v294
  %v479 = vunpack.c.h.b16 %v294
  %v480 = vunpack.c.l.b16 %v295
  %v481 = vunpack.c.h.b16 %v295
  %v482 = vunpack.c.l.b16 %v296
  %v483 = vunpack.c.h.b16 %v296
  %v484 = vunpack.c.l.b16 %v297
  %v485 = vunpack.c.h.b16 %v297
  %v486 = vunpack.c.l.b16 %v298
  %v487 = vunpack.c.h.b16 %v298
  %v488 = vunpack.c.l.b16 %v299
  %v489 = vunpack.c.h.b16 %v299
  %v490 = vunpack.c.l.b16 %v300
  %v491 = vunpack.c.h.b16 %v300
  %v492 = vunpack.c.l.b16 %v301
  %v493 = vunpack.c.h.b16 %v301
  %v494 = vunpack.c.l.b16 %v302
  %v495 = vunpack.c.h.b16 %v302
  %v496 = vunpack.c.l.b16 %v303
  %v497 = vunpack.c.h.b16 %v303
  %v498 = vunpack.c.l.b16 %v304
  %v499 = vunpack.c.h.b16 %v304
  %v500 = vunpack.c.l.b16 %v305
  %v501 = vunpack.c.h.b16 %v305
  %v502 = vunpack.c.l.b16 %v306
  %v503 = vunpack.c.h.b16 %v306
  %v504 = vunpack.c.l.b16 %v307
  %v505 = vunpack.c.h.b16 %v307
  %v506 = vunpack.c.l.b16 %v308
  %v507 = vunpack.c.h.b16 %v308
  %v508 = vunpack.c.l.b16 %v309
  %v509 = vunpack.c.h.b16 %v309
  %v510 = vunpack.c.l.b16 %v310
  %v511 = vunpack.c.h.b16 %v310
  %v512 = vunpack.c.l.b16 %v311
  %v513 = vunpack.c.h.b16 %v311
  %v514 = vunpack.c.l.b16 %v312
  %v515 = vunpack.c.h.b16 %v312
  %v516 = vunpack.c.l.b16 %v313
  %v517 = vunpack.c.h.b16 %v313
  %v518 = vunpack.c.l.b16 %v314
  %v519 = vunpack.c.h.b16 %v314
  %v520 = vunpack.c.l.b16 %v315
  %v521 = vunpack.c.h.b16 %v315
  %v522 = vunpack.c.l.b16 %v316
  %v523 = vunpack.c.h.b16 %v316
  %v524 = vunpack.c.l.b16 %v317
  %v525 = vunpack.c.h.b16 %v317
  %v526 = vunpack.c.l.b16 %v318
  %v527 = vunpack.c.h.b16 %v318
  %v528 = vunpack.c.l.b16 %v319
  %v529 = vunpack.c.h.b16 %v319
  %v530 = vunpack.c.l.b16 %v320
  %v531 = vunpack.c.h.b16 %v320
  %v532 = vunpack.c.l.b16 %v321
  %v533 = vunpack.c.h.b16 %v321
  %v534 = vunpack.c.l.b16 %v322
  %v535 = vunpack.c.h.b16 %v322
  %v536 = vunpack.c.l.b16 %v323
  %v537 = vunpack.c.h.b16 %v323
  %v538 = vunpack.c.l.b16 %v324
  %v539 = vunpack.c.h.b16 %v324
  %v540 = vunpack.c.l.b16 %v325
  %v541 = vunpack.c.h.b16 %v325
  %v542 = vunpack.c.l.b16 %v326
  %v543 = vunpack.c.h.b16 %v326
  %v544 = vunpack.c.l.b16 %v327
  %v545 = vunpack.c.h.b16 %v327
  %v546 = vunpack.c.l.b16 %v328
  %v547 = vunpack.c.h.b16 %v328
  %v548 = vunpack.c.l.b16 %v329
  %v549 = vunpack.c.h.b16 %v329
  %v550 = vunpack.c.l.b16 %v330
  %v551 = vunpack.c.h.b16 %v330
  %v552 = vunpack.c.l.b16 %v331
  %v553 = vunpack.c.h.b16 %v331
  %v554 = vunpack.c.l.b16 %v332
  %v555 = vunpack.c.h.b16 %v332
  %v556 = vunpack.c.l.b16 %v333
  %v557 = vunpack.c.h.b16 %v333
  %v558 = vunpack.c.l.b16 %v334
  %v559 = vunpack.c.h.b16 %v334
  %v560 = vunpack.c.l.b16 %v335
  %v561 = vunpack.c.h.b16 %v335
  %v562 = vunpack.c.l.b16 %v336
  %v563 = vunpack.c.h.b16 %v336
  %v564 = vunpack.c.l.b16 %v337
  %v565 = vunpack.c.h.b16 %v337
  %v566 = vunpack.c.l.b16 %v338
  %v567 = vunpack.c.h.b16 %v338
  %v568 = vunpack.c.l.b16 %v339
  %v569 = vunpack.c.h.b16 %v339
  %v570 = vunpack.c.l.b16 %v340
  %v571 = vunpack.c.h.b16 %v340
  %v572 = vunpack.c.l.b16 %v341
  %v573 = vunpack.c.h.b16 %v341
  %v574 = vunpack.c.l.b16 %v342
  %v575 = vunpack.c.h.b16 %v342
  %v576 = vunpack.c.l.b16 %v343
  %v577 = vunpack.c.h.b16 %v343
  %v578 = vunpack.c.l.b16 %v344
  %v579 = vunpack.c.h.b16 %v344
  %v580 = vunpack.c.l.b16 %v345
  %v581 = vunpack.c.h.b16 %v345
  %v582 = vunpack.c.l.b16 %v346
  %v583 = vunpack.c.h.b16 %v346
  %v584 = vunpack.c.l.b16 %v347
  %v585 = vunpack.c.h.b16 %v347
  %v586 = vunpack.c.l.b16 %v348
  %v587 = vunpack.c.h.b16 %v348
  %v588 = vunpack.c.l.b16 %v349
  %v589 = vunpack.c.h.b16 %v349
  %v590 = vunpack.c.l.b16 %v350
  %v591 = vunpack.c.h.b16 %v350
  %v592 = vunpack.c.l.b16 %v351
  %v593 = vunpack.c.h.b16 %v351
  %v594 = vunpack.c.l.b16 %v352
  %v595 = vunpack.c.h.b16 %v352
  %v596 = vpack.c.b16 %v436, %v434
  %v597 = vpack.c.b16 %v437, %v435
  %v598 = vpack.c.b16 %v440, %v438
  %v599 = vpack.c.b16 %v441, %v439
  %v600 = vpack.c.b16 %v444, %v442
  %v601 = vpack.c.b16 %v445, %v443
  %v602 = vpack.c.b16 %v448, %v446
  %v603 = vpack.c.b16 %v449, %v447
  %v604 = vpack.c.b16 %v452, %v450
  %v605 = vpack.c.b16 %v453, %v451
  %v606 = vpack.c.b16 %v456, %v454
  %v607 = vpack.c.b16 %v457, %v455
  %v608 = vpack.c.b16 %v460, %v458
  %v609 = vpack.c.b16 %v461, %v459
  %v610 = vpack.c.b16 %v464, %v462
  %v611 = vpack.c.b16 %v465, %v463
  %v612 = vpack.c.b16 %v468, %v466
  %v613 = vpack.c.b16 %v469, %v467
  %v614 = vpack.c.b16 %v472, %v470
  %v615 = vpack.c.b16 %v473, %v471
  %v616 = vpack.c.b16 %v476, %v474
  %v617 = vpack.c.b16 %v477, %v475
  %v618 = vpack.c.b16 %v480, %v478
  %v619 = vpack.c.b16 %v481, %v479
  %v620 = vpack.c.b16 %v484, %v482
  %v621 = vpack.c.b16 %v485, %v483
  %v622 = vpack.c.b16 %v488, %v486
  %v623 = vpack.c.b16 %v489, %v487
  %v624 = vpack.c.b16 %v492, %v490
  %v625 = vpack.c.b16 %v493, %v491
  %v626 = vpack.c.b16 %v496, %v494
  %v627 = vpack.c.b16 %v497, %v495
  %v628 = vpack.c.b16 %v500, %v498
  %v629 = vpack.c.b16 %v501, %v499
  %v630 = vpack.c.b16 %v504, %v502
  %v631 = vpack.c.b16 %v505, %v503
  %v632 = vpack.c.b16 %v508, %v506
  %v633 = vpack.c.b16 %v509, %v507
  %v634 = vpack.c.b16 %v512, %v510
  %v635 = vpack.c.b16 %v513, %v511
  %v636 = vpack.c.b16 %v516, %v514
  %v637 = vpack.c.b16 %v517, %v515
  %v638 = vpack.c.b16 %v520, %v518
  %v639 = vpack.c.b16 %v521, %v519
  %v640 = vpack.c.b16 %v524, %v522
  %v641 = vpack.c.b16 %v525, %v523
  %v642 = vpack.c.b16 %v528, %v526
  %v643 = vpack.c.b16 %v529, %v527
  %v644 = vpack.c.b16 %v532, %v530
  %v645 = vpack.c.b16 %v533, %v531
  %v646 = vpack.c.b16 %v536, %v534
  %v647 = vpack.c.b16 %v537, %v535
  %v648 = vpack.c.b16 %v540, %v538
  %v649 = vpack.c.b16 %v541, %v539
  %v650 = vpack.c.b16 %v544, %v542
  %v651 = vpack.c.b16 %v545, %v543
  %v652 = vpack.c.b16 %v548, %v546
  %v653 = vpack.c.b16 %v549, %v547
  %v654 = vpack.c.b16 %v552, %v550
  %v655 = vpack.c.b16 %v553, %v551
  %v656 = vpack.c.b16 %v556, %v554
  %v657 = vpack.c.b16 %v557, %v555
  %v658 = vpack.c.b16 %v560, %v558
  %v659 = vpack.c.b16 %v561, %v559
  %v660 = vpack.c.b16 %v564, %v562
  %v661 = vpack.c.b16 %v565, %v563
  %v662 = vpack.c.b16 %v568, %v566
  %v663 = vpack.c.b16 %v569, %v567
  %v664 = vpack.c.b16 %v572, %v570
  %v665 = vpack.c.b16 %v573, %v571
  %v666 = vpack.c.b16 %v576, %v574
  %v667 = vpack.c.b16 %v577, %v575
  %v668 = vpack.c.b16 %v580, %v578
  %v669 = vpack.c.b16 %v581, %v579
  %v670 = vpack.c.b16 %v584, %v582
  %v671 = vpack.c.b16 %v585, %v583
  %v672 = vpack.c.b16 %v588, %v586
  %v673 = vpack.c.b16 %v589, %v587
  %v674 = vpack.c.b16 %v592, %v590
  %v675 = vpack.c.b16 %v593, %v591
  %v676 = vpack.c.b16 %v594, %v594
  %v677 = vpack.c.b16 %v595, %v595
  %vm758 = vcmask 64512
  %v759 = vsel %vm758, %v82, 0
  %v761 = vsel %vm758, %v271, 0
  %v764 = vsel %vm758, %v248, 0
  %vm766 = vcmask 1043456
  %v768 = vsel %vm766, %v676, 0
  %v771 = vsel %vm766, %v677, 0
  %773 = vmatprep.subr.bf16.mxu0 %v597
  %774 = vmatpush1.bf16.msra.mxu0 %v596
  %775 = vmatprep.subr.bf16.mxu0 %v599
  %776 = vmatpush1.bf16.msra.mxu0 %v598
  %777 = vmatprep.subr.bf16.mxu0 %v601
  %778 = vmatpush1.bf16.msra.mxu0 %v600
  %779 = vmatprep.subr.bf16.mxu0 %v603
  %780 = vmatpush1.bf16.msra.mxu0 %v602
  %781 = vmatprep.subr.bf16.mxu0 %v605
  %782 = vmatpush1.bf16.msra.mxu0 %v604
  %783 = vmatprep.subr.bf16.mxu0 %v607
  %784 = vmatpush1.bf16.msra.mxu0 %v606
  %785 = vmatprep.subr.bf16.mxu0 %v609
  %786 = vmatpush1.bf16.msra.mxu0 %v608
  %787 = vmatprep.subr.bf16.mxu0 %v611
  %788 = vmatpush1.bf16.msra.mxu0 %v610
  %789 = vmatprep.subr.bf16.mxu0 %v613
  %790 = vmatpush1.bf16.msra.mxu0 %v612
  %791 = vmatprep.subr.bf16.mxu0 %v615
  %792 = vmatpush1.bf16.msra.mxu0 %v614
  %793 = vmatprep.subr.bf16.mxu0 %v617
  %794 = vmatpush1.bf16.msra.mxu0 %v616
  %795 = vmatprep.subr.bf16.mxu0 %v619
  %796 = vmatpush1.bf16.msra.mxu0 %v618
  %797 = vmatprep.subr.bf16.mxu0 %v621
  %798 = vmatpush1.bf16.msra.mxu0 %v620
  %799 = vmatprep.subr.bf16.mxu0 %v623
  %800 = vmatpush1.bf16.msra.mxu0 %v622
  %801 = vmatprep.subr.bf16.mxu0 %v625
  %802 = vmatpush1.bf16.msra.mxu0 %v624
  %803 = vmatprep.subr.bf16.mxu0 %v627
  %804 = vmatpush1.bf16.msra.mxu0 %v626
  %805 = vmatprep.mubr.bf16.mxu0 %v98
  %806 = vmatmul.mubr.bf16.gmra.mrb[0].mxu0 %v87
  %v807 = vpop.f32.mrb[0].mxu0
  %v808 = vadd.f32 0.0, %v807
  %v809 = vpop.f32.mrb[0].mxu0
  %v810 = vadd.f32 0.0, %v809
  %v811 = vpop.f32.mrb[0].mxu0
  %v812 = vadd.f32 0.0, %v811
  %v813 = vpop.f32.mrb[0].mxu0
  %v814 = vadd.f32 0.0, %v813
  %815 = vmatprep.mubr.bf16.mxu0 %v259
  %816 = vmatmul.mubr.bf16.gmra.mrb[0].mxu0 %v256
  %v817 = vpop.f32.mrb[0].mxu0
  %v818 = vadd.f32 0.0, %v817
  %v819 = vpop.f32.mrb[0].mxu0
  %v820 = vadd.f32 0.0, %v819
  %v821 = vpop.f32.mrb[0].mxu0
  %v822 = vadd.f32 0.0, %v821
  %v823 = vpop.f32.mrb[0].mxu0
  %v824 = vadd.f32 0.0, %v823
  %825 = vmatprep.mubr.bf16.mxu0 %v240
  %826 = vmatmul.mubr.bf16.gmra.mrb[0].mxu0 %v238
  %v827 = vpop.f32.mrb[0].mxu0
  %v828 = vadd.f32 0.0, %v827
  %v829 = vpop.f32.mrb[0].mxu0
  %v830 = vadd.f32 0.0, %v829
  %v831 = vpop.f32.mrb[0].mxu0
  %v832 = vpop.f32.mrb[0].mxu0
  %833 = vdwg.mxu0
  %834 = vmatprep.subr.bf16.mxu0 %v629
  %835 = vmatpush1.bf16.msra.mxu0 %v628
  %836 = vmatprep.subr.bf16.mxu0 %v631
  %837 = vmatpush1.bf16.msra.mxu0 %v630
  %838 = vmatprep.subr.bf16.mxu0 %v633
  %839 = vmatpush1.bf16.msra.mxu0 %v632
  %840 = vmatprep.subr.bf16.mxu0 %v635
  %841 = vmatpush1.bf16.msra.mxu0 %v634
  %842 = vmatprep.subr.bf16.mxu0 %v637
  %843 = vmatpush1.bf16.msra.mxu0 %v636
  %844 = vmatprep.subr.bf16.mxu0 %v639
  %845 = vmatpush1.bf16.msra.mxu0 %v638
  %846 = vmatprep.subr.bf16.mxu0 %v641
  %847 = vmatpush1.bf16.msra.mxu0 %v640
  %848 = vmatprep.subr.bf16.mxu0 %v643
  %849 = vmatpush1.bf16.msra.mxu0 %v642
  %850 = vmatprep.subr.bf16.mxu0 %v645
  %851 = vmatpush1.bf16.msra.mxu0 %v644
  %852 = vmatprep.subr.bf16.mxu0 %v647
  %853 = vmatpush1.bf16.msra.mxu0 %v646
  %854 = vmatprep.subr.bf16.mxu0 %v649
  %855 = vmatpush1.bf16.msra.mxu0 %v648
  %856 = vmatprep.subr.bf16.mxu0 %v651
  %857 = vmatpush1.bf16.msra.mxu0 %v650
  %858 = vmatprep.subr.bf16.mxu0 %v653
  %859 = vmatpush1.bf16.msra.mxu0 %v652
  %860 = vmatprep.subr.bf16.mxu0 %v655
  %861 = vmatpush1.bf16.msra.mxu0 %v654
  %862 = vmatprep.subr.bf16.mxu0 %v657
  %863 = vmatpush1.bf16.msra.mxu0 %v656
  %864 = vmatprep.subr.bf16.mxu0 %v659
  %865 = vmatpush1.bf16.msra.mxu0 %v658
  %866 = vmatprep.mubr.bf16.mxu0 %v120
  %867 = vmatmul.mubr.bf16.gmra.mrb[0].mxu0 %v109
  %v868 = vpop.f32.mrb[0].mxu0
  %v869 = vadd.f32 %v808, %v868
  %v870 = vpop.f32.mrb[0].mxu0
  %v871 = vadd.f32 %v810, %v870
  %v872 = vpop.f32.mrb[0].mxu0
  %v873 = vadd.f32 %v812, %v872
  %v874 = vpop.f32.mrb[0].mxu0
  %v875 = vadd.f32 %v814, %v874
  %876 = vmatprep.mubr.bf16.mxu0 %v265
  %877 = vmatmul.mubr.bf16.gmra.mrb[0].mxu0 %v262
  %v878 = vpop.f32.mrb[0].mxu0
  %v879 = vadd.f32 %v818, %v878
  %v880 = vpop.f32.mrb[0].mxu0
  %v881 = vadd.f32 %v820, %v880
  %v882 = vpop.f32.mrb[0].mxu0
  %v883 = vadd.f32 %v822, %v882
  %v884 = vpop.f32.mrb[0].mxu0
  %v885 = vadd.f32 %v824, %v884
  %886 = vmatprep.mubr.bf16.mxu0 %v244
  %887 = vmatmul.mubr.bf16.gmra.mrb[0].mxu0 %v242
  %v888 = vpop.f32.mrb[0].mxu0
  %v889 = vadd.f32 %v828, %v888
  %v890 = vpop.f32.mrb[0].mxu0
  %v891 = vadd.f32 %v830, %v890
  %v892 = vpop.f32.mrb[0].mxu0
  %v893 = vpop.f32.mrb[0].mxu0
  %894 = vdwg.mxu0
  %895 = vmatprep.subr.bf16.mxu0 %v661
  %896 = vmatpush1.bf16.msra.mxu0 %v660
  %897 = vmatprep.subr.bf16.mxu0 %v663
  %898 = vmatpush1.bf16.msra.mxu0 %v662
  %899 = vmatprep.subr.bf16.mxu0 %v665
  %900 = vmatpush1.bf16.msra.mxu0 %v664
  %901 = vmatprep.subr.bf16.mxu0 %v667
  %902 = vmatpush1.bf16.msra.mxu0 %v666
  %903 = vmatprep.subr.bf16.mxu0 %v669
  %904 = vmatpush1.bf16.msra.mxu0 %v668
  %905 = vmatprep.subr.bf16.mxu0 %v671
  %906 = vmatpush1.bf16.msra.mxu0 %v670
  %907 = vmatprep.subr.bf16.mxu0 %v673
  %908 = vmatpush1.bf16.msra.mxu0 %v672
  %909 = vmatprep.subr.bf16.mxu0 %v675
  %910 = vmatpush1.bf16.msra.mxu0 %v674
  %911 = vmatprep.subr.bf16.mxu0 %v771
  %912 = vmatpush1.bf16.msra.mxu0 %v768
  %913 = vmatprep.subr.bf16.mxu0 0
  %914 = vmatpush1.bf16.msra.mxu0 0
  %915 = vmatprep.subr.bf16.mxu0 0
  %916 = vmatpush1.bf16.msra.mxu0 0
  %917 = vmatprep.subr.bf16.mxu0 0
  %918 = vmatpush1.bf16.msra.mxu0 0
  %919 = vmatprep.subr.bf16.mxu0 0
  %920 = vmatpush1.bf16.msra.mxu0 0
  %921 = vmatprep.subr.bf16.mxu0 0
  %922 = vmatpush1.bf16.msra.mxu0 0
  %923 = vmatprep.subr.bf16.mxu0 0
  %924 = vmatpush1.bf16.msra.mxu0 0
  %925 = vmatprep.subr.bf16.mxu0 0
  %926 = vmatpush1.bf16.msra.mxu0 0
  %927 = vmatprep.mubr.bf16.mxu0 %v759
  %928 = vmatmul.mubr.bf16.gmra.mrb[0].mxu0 %v126
  %v929 = vpop.f32.mrb[0].mxu0
  %v930 = vadd.f32 %v869, %v929
  %v931 = vpop.f32.mrb[0].mxu0
  %v932 = vadd.f32 %v871, %v931
  %v933 = vpop.f32.mrb[0].mxu0
  %v934 = vadd.f32 %v873, %v933
  %v935 = vpop.f32.mrb[0].mxu0
  %v936 = vadd.f32 %v875, %v935
  %937 = vmatprep.mubr.bf16.mxu0 %v761
  %938 = vmatmul.mubr.bf16.gmra.mrb[0].mxu0 %v268
  %v939 = vpop.f32.mrb[0].mxu0
  %v940 = vadd.f32 %v879, %v939
  %v941 = vpop.f32.mrb[0].mxu0
  %v942 = vadd.f32 %v881, %v941
  %v943 = vpop.f32.mrb[0].mxu0
  %v944 = vadd.f32 %v883, %v943
  %v945 = vpop.f32.mrb[0].mxu0
  %v946 = vadd.f32 %v885, %v945
  %947 = vmatprep.mubr.bf16.mxu0 %v764
  %948 = vmatmul.mubr.bf16.gmra.mrb[0].mxu0 %v246
  %v949 = vpop.f32.mrb[0].mxu0
  %v950 = vadd.f32 %v889, %v949
  %v951 = vpop.f32.mrb[0].mxu0
  %v952 = vadd.f32 %v891, %v951
  %v953 = vpop.f32.mrb[0].mxu0
  %v954 = vpop.f32.mrb[0].mxu0
  %955 = vdwg.mxu0
  %v956 = vlaneseq
  %v957 = vshrl.u32 %v956, 7
  %v958 = vadd.s32 %v957, 8
  %v959 = vadd.s32 %v957, 16
  %v960 = vadd.s32 %v957, 24
  %v961 = vadd.s32 %v957, 32
  %vm962 = vcmp.eq.s32.totalorder %v957, 0
  %vm963 = vcmp.eq.s32.totalorder %v958, 0
  %vm964 = vcmp.eq.s32.totalorder %v959, 0
  %vm965 = vcmp.eq.s32.totalorder %v960, 0
  %vm966 = vcmp.eq.s32.totalorder %v961, 0
  %vm967 = vcmp.eq.s32.totalorder %v957, 17
  %vm968 = vcmp.eq.s32.totalorder %v958, 17
  %vm969 = vcmp.eq.s32.totalorder %v959, 17
  %vm970 = vcmp.eq.s32.totalorder %v960, 17
  %vm971 = vcmp.eq.s32.totalorder %v961, 17
  %vm972 = vmor %vm962, %vm967
  %vm973 = vmor %vm963, %vm968
  %vm974 = vmor %vm964, %vm969
  %vm975 = vmor %vm965, %vm970
  %vm976 = vmor %vm966, %vm971
  %vm977 = vcmp.eq.s32.totalorder %v957, 18
  %vm978 = vcmp.eq.s32.totalorder %v958, 18
  %vm979 = vcmp.eq.s32.totalorder %v959, 18
  %vm980 = vcmp.eq.s32.totalorder %v960, 18
  %vm981 = vcmp.eq.s32.totalorder %v961, 18
  %vm982 = vmor %vm972, %vm977
  %vm983 = vmor %vm973, %vm978
  %vm984 = vmor %vm974, %vm979
  %vm985 = vmor %vm975, %vm980
  %vm986 = vmor %vm976, %vm981
  %vm987 = vcmp.eq.s32.totalorder %v957, 35
  %vm988 = vcmp.eq.s32.totalorder %v958, 35
  %vm989 = vcmp.eq.s32.totalorder %v959, 35
  %vm990 = vcmp.eq.s32.totalorder %v960, 35
  %vm991 = vcmp.eq.s32.totalorder %v961, 35
  %vm992 = vmor %vm982, %vm987
  %vm993 = vmor %vm983, %vm988
  %vm994 = vmor %vm984, %vm989
  %vm995 = vmor %vm985, %vm990
  %vm996 = vmor %vm986, %vm991
  %v997 = vmax.f32 %v930, 0.0
  %v998 = vmax.f32 %v932, 0.0
  %v999 = vmax.f32 %v934, 0.0
  %v1000 = vmax.f32 %v936, 0.0
  %v1001 = vmax.f32 %v940, 0.0
  %v1002 = vmax.f32 %v942, 0.0
  %v1003 = vmax.f32 %v944, 0.0
  %v1004 = vmax.f32 %v946, 0.0
  %v1005 = vmax.f32 %v950, 0.0
  %v1006 = vmax.f32 %v952, 0.0
  %v1007 = vsel %vm992, 1, 0
  %v1008 = vsel %vm993, 1, 0
  %v1009 = vsel %vm994, 1, 0
  %v1010 = vsel %vm995, 1, 0
  %v1011 = vsel %vm996, 1, 0
  %vm1012 = vcmp.eq.s32.totalorder %v1007, 1
  %vm1013 = vcmp.eq.s32.totalorder %v1008, 1
  %vm1014 = vcmp.eq.s32.totalorder %v1009, 1
  %vm1015 = vcmp.eq.s32.totalorder %v1010, 1
  %vm1016 = vcmp.eq.s32.totalorder %v1011, 1
  %v1017 = vsel %vm1012, 0.0, %v997
  %v1018 = vsel %vm1012, 0.0, %v998
  %v1019 = vsel %vm1013, 0.0, %v999
  %v1020 = vsel %vm1013, 0.0, %v1000
  %v1021 = vsel %vm1014, 0.0, %v1001
  %v1022 = vsel %vm1014, 0.0, %v1002
  %v1023 = vsel %vm1015, 0.0, %v1003
  %v1024 = vsel %vm1015, 0.0, %v1004
  %v1025 = vsel %vm1016, 0.0, %v1005
  %v1026 = vsel %vm1016, 0.0, %v1006
  %v1027 = vpack.c.bf16 %v1019, %v1017
  %v1028 = vpack.c.bf16 %v1020, %v1018
  %v1029 = vpack.c.bf16 %v1023, %v1021
  %v1030 = vpack.c.bf16 %v1024, %v1022
  %v1031 = vpack.c.bf16 %v1025, %v1025
  %v1032 = vpack.c.bf16 %v1026, %v1026
  %1035 = vrot.lane.b32.xlu0 %v1027, 120
  %v1036 = vpop.permute.xlu0 %1035
  %1037 = vrot.lane.b32.xlu0 %v1028, 120
  %v1038 = vpop.permute.xlu0 %1037
  %vm1039 = vcmask 982016
  %v1040 = vsel %vm1039, %v1036, %v1038
  %1042 = vrot.lane.b32.xlu0 %v1027, 112
  %v1043 = vpop.permute.xlu0 %1042
  %1044 = vrot.lane.b32.xlu0 %v1028, 112
  %v1045 = vpop.permute.xlu0 %1044
  %vm1046 = vcmask 916480
  %v1047 = vsel %vm1046, %v1043, %v1045
  %v1050 = vshrl.u32 %v1027, 16
  %v1052 = vshll.u32 %v1027, 16
  %v1054 = vrot.slane %v1052, 1
  %v1055 = vor.u32 %v1050, %v1054
  %v1057 = vshll.u32 %v1029, 16
  %v1059 = vrot.slane %v1057, 1
  %v1060 = vsel %vm41, %v1055, %v1059
  %v1063 = vshrl.u32 %v1028, 16
  %v1065 = vshll.u32 %v1028, 16
  %v1067 = vrot.slane %v1065, 1
  %v1068 = vor.u32 %v1063, %v1067
  %v1070 = vshll.u32 %v1030, 16
  %v1072 = vrot.slane %v1070, 1
  %v1073 = vsel %vm41, %v1068, %v1072
  %1074 = vrot.lane.b32.xlu0 %v1060, 120
  %v1075 = vpop.permute.xlu0 %1074
  %1076 = vrot.lane.b32.xlu0 %v1073, 120
  %v1077 = vpop.permute.xlu0 %1076
  %v1078 = vsel %vm1039, %v1075, %v1077
  %1080 = vrot.lane.b32.xlu0 %v1060, 112
  %v1081 = vpop.permute.xlu0 %1080
  %1082 = vrot.lane.b32.xlu0 %v1073, 112
  %v1083 = vpop.permute.xlu0 %1082
  %v1084 = vsel %vm1046, %v1081, %v1083
  %v1087 = vrot.slane %v1027, 1
  %v1088 = vrot.slane %v1029, 1
  %v1089 = vsel %vm69, %v1087, %v1088
  %v1092 = vrot.slane %v1028, 1
  %v1093 = vrot.slane %v1030, 1
  %v1094 = vsel %vm69, %v1092, %v1093
  %1095 = vrot.lane.b32.xlu0 %v1089, 120
  %v1096 = vpop.permute.xlu0 %1095
  %1097 = vrot.lane.b32.xlu0 %v1094, 120
  %v1098 = vpop.permute.xlu0 %1097
  %v1099 = vsel %vm1039, %v1096, %v1098
  %1101 = vrot.lane.b32.xlu0 %v1089, 112
  %v1102 = vpop.permute.xlu0 %1101
  %1103 = vrot.lane.b32.xlu0 %v1094, 112
  %v1104 = vpop.permute.xlu0 %1103
  %v1105 = vsel %vm1046, %v1102, %v1104
  %1109 = vrot.lane.b32.xlu0 %v1029, 120
  %v1110 = vpop.permute.xlu0 %1109
  %1111 = vrot.lane.b32.xlu0 %v1030, 120
  %v1112 = vpop.permute.xlu0 %1111
  %1113 = vrot.lane.b32.xlu0 %v1031, 120
  %v1114 = vpop.permute.xlu0 %1113
  %1115 = vrot.lane.b32.xlu0 %v1032, 120
  %v1116 = vpop.permute.xlu0 %1115
  %v1117 = vsel %vm1039, %v1110, %v1112
  %v1118 = vsel %vm1039, %v1114, %v1116
  %1119 = vrot.lane.b32.xlu0 %v1029, 112
  %v1120 = vpop.permute.xlu0 %1119
  %1121 = vrot.lane.b32.xlu0 %v1030, 112
  %v1122 = vpop.permute.xlu0 %1121
  %1123 = vrot.lane.b32.xlu0 %v1031, 112
  %v1124 = vpop.permute.xlu0 %1123
  %1125 = vrot.lane.b32.xlu0 %v1032, 112
  %v1126 = vpop.permute.xlu0 %1125
  %v1127 = vsel %vm1046, %v1120, %v1122
  %v1128 = vsel %vm1046, %v1124, %v1126
  %v1129 = vshrl.u32 %v1029, 16
  %v1131 = vor.u32 %v1129, %v1059
  %v1133 = vshll.u32 %v1031, 16
  %v1135 = vrot.slane %v1133, 1
  %v1136 = vsel %vm41, %v1131, %v1135
  %v1137 = vshrl.u32 %v1031, 16
  %v1139 = vor.u32 %v1137, %v1135
  %v1140 = vshrl.u32 %v1030, 16
  %v1142 = vor.u32 %v1140, %v1072
  %v1144 = vshll.u32 %v1032, 16
  %v1146 = vrot.slane %v1144, 1
  %v1147 = vsel %vm41, %v1142, %v1146
  %v1148 = vshrl.u32 %v1032, 16
  %v1150 = vor.u32 %v1148, %v1146
  %1151 = vrot.lane.b32.xlu0 %v1136, 120
  %v1152 = vpop.permute.xlu0 %1151
  %1153 = vrot.lane.b32.xlu0 %v1147, 120
  %v1154 = vpop.permute.xlu0 %1153
  %1155 = vrot.lane.b32.xlu0 %v1139, 120
  %v1156 = vpop.permute.xlu0 %1155
  %1157 = vrot.lane.b32.xlu0 %v1150, 120
  %v1158 = vpop.permute.xlu0 %1157
  %v1159 = vsel %vm1039, %v1152, %v1154
  %v1160 = vsel %vm1039, %v1156, %v1158
  %1161 = vrot.lane.b32.xlu0 %v1136, 112
  %v1162 = vpop.permute.xlu0 %1161
  %1163 = vrot.lane.b32.xlu0 %v1147, 112
  %v1164 = vpop.permute.xlu0 %1163
  %1165 = vrot.lane.b32.xlu0 %v1139, 112
  %v1166 = vpop.permute.xlu0 %1165
  %1167 = vrot.lane.b32.xlu0 %v1150, 112
  %v1168 = vpop.permute.xlu0 %1167
  %v1169 = vsel %vm1046, %v1162, %v1164
  %v1170 = vsel %vm1046, %v1166, %v1168
  %v1171 = vrot.slane %v1031, 1
  %v1172 = vsel %vm69, %v1088, %v1171
  %v1173 = vrot.slane %v1032, 1
  %v1174 = vsel %vm69, %v1093, %v1173
  %1175 = vrot.lane.b32.xlu0 %v1172, 120
  %v1176 = vpop.permute.xlu0 %1175
  %1177 = vrot.lane.b32.xlu0 %v1174, 120
  %v1178 = vpop.permute.xlu0 %1177
  %1179 = vrot.lane.b32.xlu0 %v1171, 120
  %v1180 = vpop.permute.xlu0 %1179
  %1181 = vrot.lane.b32.xlu0 %v1173, 120
  %v1182 = vpop.permute.xlu0 %1181
  %v1183 = vsel %vm1039, %v1176, %v1178
  %v1184 = vsel %vm1039, %v1180, %v1182
  %1185 = vrot.lane.b32.xlu0 %v1172, 112
  %v1186 = vpop.permute.xlu0 %1185
  %1187 = vrot.lane.b32.xlu0 %v1174, 112
  %v1188 = vpop.permute.xlu0 %1187
  %1189 = vrot.lane.b32.xlu0 %v1171, 112
  %v1190 = vpop.permute.xlu0 %1189
  %1191 = vrot.lane.b32.xlu0 %v1173, 112
  %v1192 = vpop.permute.xlu0 %1191
  %v1193 = vsel %vm1046, %v1186, %v1188
  %v1194 = vsel %vm1046, %v1190, %v1192
  %v1195 = vrot.slane %v1117, 1
  %v1196 = vrot.slane %v1118, 1
  %v1197 = vsel %vm69, %v1195, %v1196
  %v1198 = vrot.slane %v1127, 1
  %v1199 = vrot.slane %v1128, 1
  %v1200 = vsel %vm69, %v1198, %v1199
  %v1201 = vrot.slane %v1136, 1
  %v1202 = vrot.slane %v1139, 1
  %v1203 = vsel %vm69, %v1201, %v1202
  %v1204 = vrot.slane %v1159, 1
  %v1205 = vrot.slane %v1160, 1
  %v1206 = vsel %vm69, %v1204, %v1205
  %v1207 = vrot.slane %v1169, 1
  %v1208 = vrot.slane %v1170, 1
  %v1209 = vsel %vm69, %v1207, %v1208
  %v1210 = vrot.slane %v1172, 1
  %v1211 = vrot.slane %v1171, 1
  %v1212 = vsel %vm69, %v1210, %v1211
  %v1213 = vrot.slane %v1183, 1
  %v1214 = vrot.slane %v1184, 1
  %v1215 = vsel %vm69, %v1213, %v1214
  %v1216 = vrot.slane %v1193, 1
  %v1217 = vrot.slane %v1194, 1
  %v1218 = vsel %vm69, %v1216, %v1217
  %v1228 = vld [vmem:[%s2] sm:$0xf]
  %v1229 = vld [vmem:[%s2 + $0x4] sm:$0xf]
  %v1230 = vld [vmem:[%s2 + $0x8] sm:$0xf]
  %v1231 = vld [vmem:[%s2 + $0xc] sm:$0xf]
  %v1232 = vld [vmem:[%s2 + $0x10] sm:$0xf]
  %v1233 = vld [vmem:[%s2 + $0x14] sm:$0xf]
  %v1234 = vld [vmem:[%s2 + $0x18] sm:$0xf]
  %v1235 = vld [vmem:[%s2 + $0x1c] sm:$0xf]
  %v1236 = vld [vmem:[%s2 + $0x20] sm:$0xf]
  %v1237 = vld [vmem:[%s2 + $0x24] sm:$0xf]
  %v1238 = vld [vmem:[%s2 + $0x28] sm:$0xf]
  %v1239 = vld [vmem:[%s2 + $0x2c] sm:$0xf]
  %v1240 = vld [vmem:[%s2 + $0x30] sm:$0xf]
  %v1241 = vld [vmem:[%s2 + $0x34] sm:$0xf]
  %v1242 = vld [vmem:[%s2 + $0x38] sm:$0xf]
  %v1243 = vld [vmem:[%s2 + $0x3c] sm:$0xf]
  %v1244 = vld [vmem:[%s2 + $0x40] sm:$0xf]
  %v1245 = vld [vmem:[%s2 + $0x44] sm:$0xf]
  %v1246 = vld [vmem:[%s2 + $0x48] sm:$0xf]
  %v1247 = vld [vmem:[%s2 + $0x4c] sm:$0xf]
  %v1248 = vld [vmem:[%s2 + $0x50] sm:$0xf]
  %v1249 = vld [vmem:[%s2 + $0x54] sm:$0xf]
  %v1250 = vld [vmem:[%s2 + $0x58] sm:$0xf]
  %v1251 = vld [vmem:[%s2 + $0x5c] sm:$0xf]
  %v1252 = vld [vmem:[%s2 + $0x60] sm:$0xf]
  %v1253 = vld [vmem:[%s2 + $0x64] sm:$0xf]
  %v1254 = vld [vmem:[%s2 + $0x68] sm:$0xf]
  %v1255 = vld [vmem:[%s2 + $0x6c] sm:$0xf]
  %v1256 = vld [vmem:[%s2 + $0x70] sm:$0xf]
  %v1257 = vld [vmem:[%s2 + $0x74] sm:$0xf]
  %v1258 = vld [vmem:[%s2 + $0x78] sm:$0xf]
  %v1259 = vld [vmem:[%s2 + $0x7c] sm:$0xf]
  %v1260 = vld [vmem:[%s2 + $0x80] sm:$0xf]
  %v1261 = vld [vmem:[%s2 + $0x84] sm:$0xf]
  %v1262 = vld [vmem:[%s2 + $0x88] sm:$0xf]
  %v1263 = vld [vmem:[%s2 + $0x8c] sm:$0xf]
  %v1264 = vld [vmem:[%s2 + $0x90] sm:$0xf]
  %v1265 = vld [vmem:[%s2 + $0x94] sm:$0xf]
  %v1266 = vld [vmem:[%s2 + $0x98] sm:$0xf]
  %v1267 = vld [vmem:[%s2 + $0x9c] sm:$0xf]
  %v1268 = vld [vmem:[%s2 + $0xa0] sm:$0xf]
  %v1269 = vld [vmem:[%s2 + $0xa4] sm:$0xf]
  %v1270 = vld [vmem:[%s2 + $0xa8] sm:$0xf]
  %v1271 = vld [vmem:[%s2 + $0xac] sm:$0xf]
  %v1272 = vld [vmem:[%s2 + $0xb0] sm:$0xf]
  %v1273 = vld [vmem:[%s2 + $0xb4] sm:$0xf]
  %v1274 = vld [vmem:[%s2 + $0xb8] sm:$0xf]
  %v1275 = vld [vmem:[%s2 + $0xbc] sm:$0xf]
  %v1276 = vld [vmem:[%s2 + $0xc0] sm:$0xf]
  %v1277 = vld [vmem:[%s2 + $0xc4] sm:$0xf]
  %v1278 = vld [vmem:[%s2 + $0xc8] sm:$0xf]
  %v1279 = vld [vmem:[%s2 + $0xcc] sm:$0xf]
  %v1280 = vld [vmem:[%s2 + $0xd0] sm:$0xf]
  %v1281 = vld [vmem:[%s2 + $0xd4] sm:$0xf]
  %v1282 = vld [vmem:[%s2 + $0xd8] sm:$0xf]
  %v1283 = vld [vmem:[%s2 + $0xdc] sm:$0xf]
  %v1284 = vld [vmem:[%s2 + $0xe0] sm:$0xf]
  %v1285 = vld [vmem:[%s2 + $0xe4] sm:$0xf]
  %v1286 = vld [vmem:[%s2 + $0xe8] sm:$0xf]
  %v1287 = vld [vmem:[%s2 + $0xec] sm:$0xf]
  %v1288 = vld [vmem:[%s2 + $0xf0] sm:$0xf]
  %v1289 = vld [vmem:[%s2 + $0xf4] sm:$0xf]
  %v1290 = vld [vmem:[%s2 + $0xf8] sm:$0xf]
  %v1291 = vld [vmem:[%s2 + $0xfc] sm:$0xf]
  %v1292 = vld [vmem:[%s2 + $0x100] sm:$0xf]
  %v1293 = vld [vmem:[%s2 + $0x104] sm:$0xf]
  %v1294 = vld [vmem:[%s2 + $0x108] sm:$0xf]
  %v1295 = vld [vmem:[%s2 + $0x10c] sm:$0xf]
  %v1296 = vld [vmem:[%s2 + $0x110] sm:$0xf]
  %v1297 = vld [vmem:[%s2 + $0x114] sm:$0xf]
  %v1298 = vld [vmem:[%s2 + $0x118] sm:$0xf]
  %v1299 = vld [vmem:[%s2 + $0x11c] sm:$0xf]
  %v1300 = vld [vmem:[%s2 + $0x120] sm:$0xf]
  %v1301 = vld [vmem:[%s2 + $0x124] sm:$0xf]
  %v1302 = vld [vmem:[%s2 + $0x128] sm:$0xf]
  %v1303 = vld [vmem:[%s2 + $0x12c] sm:$0xf]
  %v1304 = vld [vmem:[%s2 + $0x130] sm:$0xf]
  %v1305 = vld [vmem:[%s2 + $0x134] sm:$0xf]
  %v1306 = vld [vmem:[%s2 + $0x138] sm:$0xf]
  %v1307 = vld [vmem:[%s2 + $0x13c] sm:$0xf]
  %v1308 = vld [vmem:[%s2 + $0x140] sm:$0xf]
  %v1309 = vld [vmem:[%s2 + $0x144] sm:$0xf]
  %v1310 = vld [vmem:[%s2 + $0x148] sm:$0xf]
  %v1311 = vld [vmem:[%s2 + $0x14c] sm:$0xf]
  %v1312 = vld [vmem:[%s2 + $0x150] sm:$0xf]
  %v1313 = vld [vmem:[%s2 + $0x154] sm:$0xf]
  %v1314 = vld [vmem:[%s2 + $0x158] sm:$0xf]
  %v1315 = vld [vmem:[%s2 + $0x15c] sm:$0xf]
  %v1316 = vld [vmem:[%s2 + $0x160] sm:$0xf]
  %v1317 = vld [vmem:[%s2 + $0x164] sm:$0xf]
  %v1318 = vld [vmem:[%s2 + $0x168] sm:$0xf]
  %v1319 = vld [vmem:[%s2 + $0x16c] sm:$0xf]
  %v1320 = vld [vmem:[%s2 + $0x170] sm:$0xf]
  %v1321 = vld [vmem:[%s2 + $0x174] sm:$0xf]
  %v1322 = vld [vmem:[%s2 + $0x178] sm:$0xf]
  %v1323 = vld [vmem:[%s2 + $0x17c] sm:$0xf]
  %v1324 = vld [vmem:[%s2 + $0x180] sm:$0xf]
  %v1325 = vld [vmem:[%s2 + $0x184] sm:$0xf]
  %v1326 = vld [vmem:[%s2 + $0x188] sm:$0xf]
  %v1327 = vld [vmem:[%s2 + $0x18c] sm:$0xf]
  %v1328 = vld [vmem:[%s2 + $0x190] sm:$0xf]
  %v1329 = vld [vmem:[%s2 + $0x194] sm:$0xf]
  %v1330 = vld [vmem:[%s2 + $0x198] sm:$0xf]
  %v1331 = vld [vmem:[%s2 + $0x19c] sm:$0xf]
  %v1332 = vld [vmem:[%s2 + $0x1a0] sm:$0xf]
  %v1333 = vld [vmem:[%s2 + $0x1a4] sm:$0xf]
  %v1334 = vld [vmem:[%s2 + $0x1a8] sm:$0xf]
  %v1335 = vld [vmem:[%s2 + $0x1ac] sm:$0xf]
  %v1336 = vld [vmem:[%s2 + $0x1b0] sm:$0xf]
  %v1337 = vld [vmem:[%s2 + $0x1b4] sm:$0xf]
  %v1338 = vld [vmem:[%s2 + $0x1b8] sm:$0xf]
  %v1339 = vld [vmem:[%s2 + $0x1bc] sm:$0xf]
  %v1340 = vld [vmem:[%s2 + $0x1c0] sm:$0xf]
  %v1341 = vld [vmem:[%s2 + $0x1c4] sm:$0xf]
  %v1342 = vld [vmem:[%s2 + $0x1c8] sm:$0xf]
  %v1343 = vld [vmem:[%s2 + $0x1cc] sm:$0xf]
  %v1344 = vld [vmem:[%s2 + $0x1d0] sm:$0xf]
  %v1345 = vld [vmem:[%s2 + $0x1d4] sm:$0xf]
  %v1346 = vld [vmem:[%s2 + $0x1d8] sm:$0xf]
  %v1347 = vld [vmem:[%s2 + $0x1dc] sm:$0xf]
  %v1348 = vld [vmem:[%s2 + $0x1e0] sm:$0xf]
  %v1349 = vld [vmem:[%s2 + $0x1e4] sm:$0xf]
  %v1350 = vld [vmem:[%s2 + $0x1e8] sm:$0xf]
  %v1351 = vld [vmem:[%s2 + $0x1ec] sm:$0xf]
  %v1352 = vld [vmem:[%s2 + $0x1f0] sm:$0xf]
  %v1353 = vld [vmem:[%s2 + $0x1f4] sm:$0xf]
  %v1354 = vld [vmem:[%s2 + $0x1f8] sm:$0xf]
  %v1355 = vld [vmem:[%s2 + $0x1fc] sm:$0xf]
  %v1356 = vld [vmem:[%s2 + $0x200] sm:$0xf]
  %v1357 = vld [vmem:[%s2 + $0x204] sm:$0xf]
  %v1358 = vld [vmem:[%s2 + $0x208] sm:$0xf]
  %v1359 = vld [vmem:[%s2 + $0x20c] sm:$0xf]
  %v1360 = vld [vmem:[%s2 + $0x210] sm:$0xf]
  %v1361 = vld [vmem:[%s2 + $0x214] sm:$0xf]
  %v1362 = vld [vmem:[%s2 + $0x218] sm:$0xf]
  %v1363 = vld [vmem:[%s2 + $0x21c] sm:$0xf]
  %v1364 = vld [vmem:[%s2 + $0x220] sm:$0xf]
  %v1365 = vld [vmem:[%s2 + $0x224] sm:$0xf]
  %v1366 = vld [vmem:[%s2 + $0x228] sm:$0xf]
  %v1367 = vld [vmem:[%s2 + $0x22c] sm:$0xf]
  %v1368 = vld [vmem:[%s2 + $0x230] sm:$0xf]
  %v1369 = vld [vmem:[%s2 + $0x234] sm:$0xf]
  %v1370 = vld [vmem:[%s2 + $0x238] sm:$0xf]
  %v1371 = vld [vmem:[%s2 + $0x23c] sm:$0xf]
  %v1372 = vld [vmem:[%s3] sm:$0xf]
  %v1373 = vld [vmem:[%s3 + $0x4] sm:$0xf]
  %v1374 = vld [vmem:[%s3 + $0x8] sm:$0xf]
  %v1375 = vld [vmem:[%s3 + $0xc] sm:$0xf]
  %v1376 = vld [vmem:[%s3 + $0x10] sm:$0xf]
  %v1377 = vld [vmem:[%s3 + $0x14] sm:$0xf]
  %v1378 = vld [vmem:[%s3 + $0x18] sm:$0xf]
  %v1379 = vld [vmem:[%s3 + $0x1c] sm:$0xf]
  %1380 = vrot.lane.b32.xlu0 %v72, 120
  %v1381 = vpop.permute.xlu0 %1380
  %1382 = vrot.lane.b32.xlu0 %v175, 120
  %v1383 = vpop.permute.xlu0 %1382
  %v1392 = vunpack.c.l.b16 %v1372
  %v1393 = vunpack.c.l.b16 %v1373
  %v1394 = vunpack.c.l.b16 %v1374
  %v1395 = vunpack.c.l.b16 %v1375
  %v1396 = vunpack.c.l.b16 %v1376
  %v1397 = vunpack.c.l.b16 %v1377
  %v1398 = vunpack.c.l.b16 %v1378
  %v1399 = vunpack.c.l.b16 %v1379
  %v1400 = vpack.c.b16 %v1393, %v1392
  %v1401 = vpack.c.b16 %v1395, %v1394
  %v1402 = vpack.c.b16 %v1397, %v1396
  %v1403 = vpack.c.b16 %v1399, %v1398
  %v1409 = vsel %vm124, %v1381, 0
  %v1412 = vsel %vm124, %v1383, 0
  %1414 = vmatprep.subr.bf16.mxu0 0
  %1415 = vmatpush1.bf16.msra.mxu0 %v1400
  %1416 = vmatprep.subr.bf16.mxu0 0
  %1417 = vmatpush1.bf16.msra.mxu0 %v1401
  %1418 = vmatprep.subr.bf16.mxu0 0
  %1419 = vmatpush1.bf16.msra.mxu0 %v1402
  %1420 = vmatprep.subr.bf16.mxu0 0
  %1421 = vmatpush1.bf16.msra.mxu0 %v1403
  %1422 = vmatprep.subr.bf16.mxu0 0
  %1423 = vmatpush1.bf16.msra.mxu0 0
  %1424 = vmatprep.subr.bf16.mxu0 0
  %1425 = vmatpush1.bf16.msra.mxu0 0
  %1426 = vmatprep.subr.bf16.mxu0 0
  %1427 = vmatpush1.bf16.msra.mxu0 0
  %1428 = vmatprep.subr.bf16.mxu0 0
  %1429 = vmatpush1.bf16.msra.mxu0 0
  %1430 = vmatprep.subr.bf16.mxu0 0
  %1431 = vmatpush1.bf16.msra.mxu0 0
  %1432 = vmatprep.subr.bf16.mxu0 0
  %1433 = vmatpush1.bf16.msra.mxu0 0
  %1434 = vmatprep.subr.bf16.mxu0 0
  %1435 = vmatpush1.bf16.msra.mxu0 0
  %1436 = vmatprep.subr.bf16.mxu0 0
  %1437 = vmatpush1.bf16.msra.mxu0 0
  %1438 = vmatprep.subr.bf16.mxu0 0
  %1439 = vmatpush1.bf16.msra.mxu0 0
  %1440 = vmatprep.subr.bf16.mxu0 0
  %1441 = vmatpush1.bf16.msra.mxu0 0
  %1442 = vmatprep.subr.bf16.mxu0 0
  %1443 = vmatpush1.bf16.msra.mxu0 0
  %1444 = vmatprep.subr.bf16.mxu0 0
  %1445 = vmatpush1.bf16.msra.mxu0 0
  %1446 = vmatprep.mubr.bf16.mxu0 0
  %1447 = vmatmul.mubr.bf16.gmra.mrb[0].mxu0 %v1409
  %v1448 = vpop.f32.mrb[0].mxu0
  %v1449 = vadd.f32 0.0, %v1448
  %v1450 = vpop.f32.mrb[0].mxu0
  %v1451 = vpop.f32.mrb[0].mxu0
  %v1452 = vadd.f32 0.0, %v1451
  %v1453 = vpop.f32.mrb[0].mxu0
  %1454 = vmatprep.mubr.bf16.mxu0 0
  %1455 = vmatmul.mubr.bf16.gmra.mrb[0].mxu0 %v1412
  %v1456 = vpop.f32.mrb[0].mxu0
  %v1457 = vadd.f32 0.0, %v1456
  %v1458 = vpop.f32.mrb[0].mxu0
  %v1459 = vpop.f32.mrb[0].mxu0
  %v1460 = vadd.f32 0.0, %v1459
  %v1461 = vpop.f32.mrb[0].mxu0
  %1462 = vdwg.mxu0
  %v1607 = vunpack.c.l.b16 %v1228
  %v1608 = vunpack.c.l.b16 %v1229
  %v1609 = vunpack.c.l.b16 %v1230
  %v1610 = vunpack.c.l.b16 %v1231
  %v1611 = vunpack.c.l.b16 %v1232
  %v1612 = vunpack.c.l.b16 %v1233
  %v1613 = vunpack.c.l.b16 %v1234
  %v1614 = vunpack.c.l.b16 %v1235
  %v1615 = vunpack.c.l.b16 %v1236
  %v1616 = vunpack.c.l.b16 %v1237
  %v1617 = vunpack.c.l.b16 %v1238
  %v1618 = vunpack.c.l.b16 %v1239
  %v1619 = vunpack.c.l.b16 %v1240
  %v1620 = vunpack.c.l.b16 %v1241
  %v1621 = vunpack.c.l.b16 %v1242
  %v1622 = vunpack.c.l.b16 %v1243
  %v1623 = vunpack.c.l.b16 %v1244
  %v1624 = vunpack.c.l.b16 %v1245
  %v1625 = vunpack.c.l.b16 %v1246
  %v1626 = vunpack.c.l.b16 %v1247
  %v1627 = vunpack.c.l.b16 %v1248
  %v1628 = vunpack.c.l.b16 %v1249
  %v1629 = vunpack.c.l.b16 %v1250
  %v1630 = vunpack.c.l.b16 %v1251
  %v1631 = vunpack.c.l.b16 %v1252
  %v1632 = vunpack.c.l.b16 %v1253
  %v1633 = vunpack.c.l.b16 %v1254
  %v1634 = vunpack.c.l.b16 %v1255
  %v1635 = vunpack.c.l.b16 %v1256
  %v1636 = vunpack.c.l.b16 %v1257
  %v1637 = vunpack.c.l.b16 %v1258
  %v1638 = vunpack.c.l.b16 %v1259
  %v1639 = vunpack.c.l.b16 %v1260
  %v1640 = vunpack.c.l.b16 %v1261
  %v1641 = vunpack.c.l.b16 %v1262
  %v1642 = vunpack.c.l.b16 %v1263
  %v1643 = vunpack.c.l.b16 %v1264
  %v1644 = vunpack.c.l.b16 %v1265
  %v1645 = vunpack.c.l.b16 %v1266
  %v1646 = vunpack.c.l.b16 %v1267
  %v1647 = vunpack.c.l.b16 %v1268
  %v1648 = vunpack.c.l.b16 %v1269
  %v1649 = vunpack.c.l.b16 %v1270
  %v1650 = vunpack.c.l.b16 %v1271
  %v1651 = vunpack.c.l.b16 %v1272
  %v1652 = vunpack.c.l.b16 %v1273
  %v1653 = vunpack.c.l.b16 %v1274
  %v1654 = vunpack.c.l.b16 %v1275
  %v1655 = vunpack.c.l.b16 %v1276
  %v1656 = vunpack.c.l.b16 %v1277
  %v1657 = vunpack.c.l.b16 %v1278
  %v1658 = vunpack.c.l.b16 %v1279
  %v1659 = vunpack.c.l.b16 %v1280
  %v1660 = vunpack.c.l.b16 %v1281
  %v1661 = vunpack.c.l.b16 %v1282
  %v1662 = vunpack.c.l.b16 %v1283
  %v1663 = vunpack.c.l.b16 %v1284
  %v1664 = vunpack.c.l.b16 %v1285
  %v1665 = vunpack.c.l.b16 %v1286
  %v1666 = vunpack.c.l.b16 %v1287
  %v1667 = vunpack.c.l.b16 %v1288
  %v1668 = vunpack.c.l.b16 %v1289
  %v1669 = vunpack.c.l.b16 %v1290
  %v1670 = vunpack.c.l.b16 %v1291
  %v1671 = vunpack.c.l.b16 %v1292
  %v1672 = vunpack.c.l.b16 %v1293
  %v1673 = vunpack.c.l.b16 %v1294
  %v1674 = vunpack.c.l.b16 %v1295
  %v1675 = vunpack.c.l.b16 %v1296
  %v1676 = vunpack.c.l.b16 %v1297
  %v1677 = vunpack.c.l.b16 %v1298
  %v1678 = vunpack.c.l.b16 %v1299
  %v1679 = vunpack.c.l.b16 %v1300
  %v1680 = vunpack.c.l.b16 %v1301
  %v1681 = vunpack.c.l.b16 %v1302
  %v1682 = vunpack.c.l.b16 %v1303
  %v1683 = vunpack.c.l.b16 %v1304
  %v1684 = vunpack.c.l.b16 %v1305
  %v1685 = vunpack.c.l.b16 %v1306
  %v1686 = vunpack.c.l.b16 %v1307
  %v1687 = vunpack.c.l.b16 %v1308
  %v1688 = vunpack.c.l.b16 %v1309
  %v1689 = vunpack.c.l.b16 %v1310
  %v1690 = vunpack.c.l.b16 %v1311
  %v1691 = vunpack.c.l.b16 %v1312
  %v1692 = vunpack.c.l.b16 %v1313
  %v1693 = vunpack.c.l.b16 %v1314
  %v1694 = vunpack.c.l.b16 %v1315
  %v1695 = vunpack.c.l.b16 %v1316
  %v1696 = vunpack.c.l.b16 %v1317
  %v1697 = vunpack.c.l.b16 %v1318
  %v1698 = vunpack.c.l.b16 %v1319
  %v1699 = vunpack.c.l.b16 %v1320
  %v1700 = vunpack.c.l.b16 %v1321
  %v1701 = vunpack.c.l.b16 %v1322
  %v1702 = vunpack.c.l.b16 %v1323
  %v1703 = vunpack.c.l.b16 %v1324
  %v1704 = vunpack.c.l.b16 %v1325
  %v1705 = vunpack.c.l.b16 %v1326
  %v1706 = vunpack.c.l.b16 %v1327
  %v1707 = vunpack.c.l.b16 %v1328
  %v1708 = vunpack.c.l.b16 %v1329
  %v1709 = vunpack.c.l.b16 %v1330
  %v1710 = vunpack.c.l.b16 %v1331
  %v1711 = vunpack.c.l.b16 %v1332
  %v1712 = vunpack.c.l.b16 %v1333
  %v1713 = vunpack.c.l.b16 %v1334
  %v1714 = vunpack.c.l.b16 %v1335
  %v1715 = vunpack.c.l.b16 %v1336
  %v1716 = vunpack.c.l.b16 %v1337
  %v1717 = vunpack.c.l.b16 %v1338
  %v1718 = vunpack.c.l.b16 %v1339
  %v1719 = vunpack.c.l.b16 %v1340
  %v1720 = vunpack.c.l.b16 %v1341
  %v1721 = vunpack.c.l.b16 %v1342
  %v1722 = vunpack.c.l.b16 %v1343
  %v1723 = vunpack.c.l.b16 %v1344
  %v1724 = vunpack.c.l.b16 %v1345
  %v1725 = vunpack.c.l.b16 %v1346
  %v1726 = vunpack.c.l.b16 %v1347
  %v1727 = vunpack.c.l.b16 %v1348
  %v1728 = vunpack.c.l.b16 %v1349
  %v1729 = vunpack.c.l.b16 %v1350
  %v1730 = vunpack.c.l.b16 %v1351
  %v1731 = vunpack.c.l.b16 %v1352
  %v1732 = vunpack.c.l.b16 %v1353
  %v1733 = vunpack.c.l.b16 %v1354
  %v1734 = vunpack.c.l.b16 %v1355
  %v1735 = vunpack.c.l.b16 %v1356
  %v1736 = vunpack.c.l.b16 %v1357
  %v1737 = vunpack.c.l.b16 %v1358
  %v1738 = vunpack.c.l.b16 %v1359
  %v1739 = vunpack.c.l.b16 %v1360
  %v1740 = vunpack.c.l.b16 %v1361
  %v1741 = vunpack.c.l.b16 %v1362
  %v1742 = vunpack.c.l.b16 %v1363
  %v1743 = vunpack.c.l.b16 %v1364
  %v1744 = vunpack.c.l.b16 %v1365
  %v1745 = vunpack.c.l.b16 %v1366
  %v1746 = vunpack.c.l.b16 %v1367
  %v1747 = vunpack.c.l.b16 %v1368
  %v1748 = vunpack.c.l.b16 %v1369
  %v1749 = vunpack.c.l.b16 %v1370
  %v1750 = vunpack.c.l.b16 %v1371
  %v1751 = vpack.c.b16 %v1608, %v1607
  %v1752 = vpack.c.b16 %v1610, %v1609
  %v1753 = vpack.c.b16 %v1612, %v1611
  %v1754 = vpack.c.b16 %v1614, %v1613
  %v1755 = vpack.c.b16 %v1616, %v1615
  %v1756 = vpack.c.b16 %v1618, %v1617
  %v1757 = vpack.c.b16 %v1620, %v1619
  %v1758 = vpack.c.b16 %v1622, %v1621
  %v1759 = vpack.c.b16 %v1624, %v1623
  %v1760 = vpack.c.b16 %v1626, %v1625
  %v1761 = vpack.c.b16 %v1628, %v1627
  %v1762 = vpack.c.b16 %v1630, %v1629
  %v1763 = vpack.c.b16 %v1632, %v1631
  %v1764 = vpack.c.b16 %v1634, %v1633
  %v1765 = vpack.c.b16 %v1636, %v1635
  %v1766 = vpack.c.b16 %v1638, %v1637
  %v1767 = vpack.c.b16 %v1640, %v1639
  %v1768 = vpack.c.b16 %v1642, %v1641
  %v1769 = vpack.c.b16 %v1644, %v1643
  %v1770 = vpack.c.b16 %v1646, %v1645
  %v1771 = vpack.c.b16 %v1648, %v1647
  %v1772 = vpack.c.b16 %v1650, %v1649
  %v1773 = vpack.c.b16 %v1652, %v1651
  %v1774 = vpack.c.b16 %v1654, %v1653
  %v1775 = vpack.c.b16 %v1656, %v1655
  %v1776 = vpack.c.b16 %v1658, %v1657
  %v1777 = vpack.c.b16 %v1660, %v1659
  %v1778 = vpack.c.b16 %v1662, %v1661
  %v1779 = vpack.c.b16 %v1664, %v1663
  %v1780 = vpack.c.b16 %v1666, %v1665
  %v1781 = vpack.c.b16 %v1668, %v1667
  %v1782 = vpack.c.b16 %v1670, %v1669
  %v1783 = vpack.c.b16 %v1672, %v1671
  %v1784 = vpack.c.b16 %v1674, %v1673
  %v1785 = vpack.c.b16 %v1676, %v1675
  %v1786 = vpack.c.b16 %v1678, %v1677
  %v1787 = vpack.c.b16 %v1680, %v1679
  %v1788 = vpack.c.b16 %v1682, %v1681
  %v1789 = vpack.c.b16 %v1684, %v1683
  %v1790 = vpack.c.b16 %v1686, %v1685
  %v1791 = vpack.c.b16 %v1688, %v1687
  %v1792 = vpack.c.b16 %v1690, %v1689
  %v1793 = vpack.c.b16 %v1692, %v1691
  %v1794 = vpack.c.b16 %v1694, %v1693
  %v1795 = vpack.c.b16 %v1696, %v1695
  %v1796 = vpack.c.b16 %v1698, %v1697
  %v1797 = vpack.c.b16 %v1700, %v1699
  %v1798 = vpack.c.b16 %v1702, %v1701
  %v1799 = vpack.c.b16 %v1704, %v1703
  %v1800 = vpack.c.b16 %v1706, %v1705
  %v1801 = vpack.c.b16 %v1708, %v1707
  %v1802 = vpack.c.b16 %v1710, %v1709
  %v1803 = vpack.c.b16 %v1712, %v1711
  %v1804 = vpack.c.b16 %v1714, %v1713
  %v1805 = vpack.c.b16 %v1716, %v1715
  %v1806 = vpack.c.b16 %v1718, %v1717
  %v1807 = vpack.c.b16 %v1720, %v1719
  %v1808 = vpack.c.b16 %v1722, %v1721
  %v1809 = vpack.c.b16 %v1724, %v1723
  %v1810 = vpack.c.b16 %v1726, %v1725
  %v1811 = vpack.c.b16 %v1728, %v1727
  %v1812 = vpack.c.b16 %v1730, %v1729
  %v1813 = vpack.c.b16 %v1732, %v1731
  %v1814 = vpack.c.b16 %v1734, %v1733
  %v1815 = vpack.c.b16 %v1736, %v1735
  %v1816 = vpack.c.b16 %v1738, %v1737
  %v1817 = vpack.c.b16 %v1740, %v1739
  %v1818 = vpack.c.b16 %v1742, %v1741
  %v1819 = vpack.c.b16 %v1744, %v1743
  %v1820 = vpack.c.b16 %v1746, %v1745
  %v1821 = vpack.c.b16 %v1748, %v1747
  %v1822 = vpack.c.b16 %v1750, %v1749
  %1895 = vmatprep.subr.bf16.mxu0 0
  %1896 = vmatpush1.bf16.msra.mxu0 %v1751
  %1897 = vmatprep.subr.bf16.mxu0 0
  %1898 = vmatpush1.bf16.msra.mxu0 %v1752
  %1899 = vmatprep.subr.bf16.mxu0 0
  %1900 = vmatpush1.bf16.msra.mxu0 %v1753
  %1901 = vmatprep.subr.bf16.mxu0 0
  %1902 = vmatpush1.bf16.msra.mxu0 %v1754
  %1903 = vmatprep.subr.bf16.mxu0 0
  %1904 = vmatpush1.bf16.msra.mxu0 %v1755
  %1905 = vmatprep.subr.bf16.mxu0 0
  %1906 = vmatpush1.bf16.msra.mxu0 %v1756
  %1907 = vmatprep.subr.bf16.mxu0 0
  %1908 = vmatpush1.bf16.msra.mxu0 %v1757
  %1909 = vmatprep.subr.bf16.mxu0 0
  %1910 = vmatpush1.bf16.msra.mxu0 %v1758
  %1911 = vmatprep.subr.bf16.mxu0 0
  %1912 = vmatpush1.bf16.msra.mxu0 %v1759
  %1913 = vmatprep.subr.bf16.mxu0 0
  %1914 = vmatpush1.bf16.msra.mxu0 %v1760
  %1915 = vmatprep.subr.bf16.mxu0 0
  %1916 = vmatpush1.bf16.msra.mxu0 %v1761
  %1917 = vmatprep.subr.bf16.mxu0 0
  %1918 = vmatpush1.bf16.msra.mxu0 %v1762
  %1919 = vmatprep.subr.bf16.mxu0 0
  %1920 = vmatpush1.bf16.msra.mxu0 %v1763
  %1921 = vmatprep.subr.bf16.mxu0 0
  %1922 = vmatpush1.bf16.msra.mxu0 %v1764
  %1923 = vmatprep.subr.bf16.mxu0 0
  %1924 = vmatpush1.bf16.msra.mxu0 %v1765
  %1925 = vmatprep.subr.bf16.mxu0 0
  %1926 = vmatpush1.bf16.msra.mxu0 %v1766
  %1927 = vmatprep.mubr.bf16.mxu0 %v1040
  %1928 = vmatmul.mubr.bf16.gmra.mrb[0].mxu0 %v1027
  %v1929 = vpop.f32.mrb[0].mxu0
  %v1930 = vadd.f32 %v1449, %v1929
  %v1931 = vpop.f32.mrb[0].mxu0
  %v1932 = vpop.f32.mrb[0].mxu0
  %v1933 = vadd.f32 %v1452, %v1932
  %v1934 = vpop.f32.mrb[0].mxu0
  %1935 = vmatprep.mubr.bf16.mxu0 %v1197
  %1936 = vmatmul.mubr.bf16.gmra.mrb[0].mxu0 %v1172
  %v1937 = vpop.f32.mrb[0].mxu0
  %v1938 = vadd.f32 %v1457, %v1937
  %v1939 = vpop.f32.mrb[0].mxu0
  %v1940 = vpop.f32.mrb[0].mxu0
  %v1941 = vadd.f32 %v1460, %v1940
  %v1942 = vpop.f32.mrb[0].mxu0
  %1943 = vdwg.mxu0
  %1944 = vmatprep.subr.bf16.mxu0 0
  %1945 = vmatpush1.bf16.msra.mxu0 %v1767
  %1946 = vmatprep.subr.bf16.mxu0 0
  %1947 = vmatpush1.bf16.msra.mxu0 %v1768
  %1948 = vmatprep.subr.bf16.mxu0 0
  %1949 = vmatpush1.bf16.msra.mxu0 %v1769
  %1950 = vmatprep.subr.bf16.mxu0 0
  %1951 = vmatpush1.bf16.msra.mxu0 %v1770
  %1952 = vmatprep.subr.bf16.mxu0 0
  %1953 = vmatpush1.bf16.msra.mxu0 %v1771
  %1954 = vmatprep.subr.bf16.mxu0 0
  %1955 = vmatpush1.bf16.msra.mxu0 %v1772
  %1956 = vmatprep.subr.bf16.mxu0 0
  %1957 = vmatpush1.bf16.msra.mxu0 %v1773
  %1958 = vmatprep.subr.bf16.mxu0 0
  %1959 = vmatpush1.bf16.msra.mxu0 %v1774
  %1960 = vmatprep.subr.bf16.mxu0 0
  %1961 = vmatpush1.bf16.msra.mxu0 %v1775
  %1962 = vmatprep.subr.bf16.mxu0 0
  %1963 = vmatpush1.bf16.msra.mxu0 %v1776
  %1964 = vmatprep.subr.bf16.mxu0 0
  %1965 = vmatpush1.bf16.msra.mxu0 %v1777
  %1966 = vmatprep.subr.bf16.mxu0 0
  %1967 = vmatpush1.bf16.msra.mxu0 %v1778
  %1968 = vmatprep.subr.bf16.mxu0 0
  %1969 = vmatpush1.bf16.msra.mxu0 %v1779
  %1970 = vmatprep.subr.bf16.mxu0 0
  %1971 = vmatpush1.bf16.msra.mxu0 %v1780
  %1972 = vmatprep.subr.bf16.mxu0 0
  %1973 = vmatpush1.bf16.msra.mxu0 %v1781
  %1974 = vmatprep.subr.bf16.mxu0 0
  %1975 = vmatpush1.bf16.msra.mxu0 %v1782
  %1976 = vmatprep.mubr.bf16.mxu0 %v1060
  %1977 = vmatmul.mubr.bf16.gmra.mrb[0].mxu0 %v1047
  %v1978 = vpop.f32.mrb[0].mxu0
  %v1979 = vadd.f32 %v1930, %v1978
  %v1980 = vpop.f32.mrb[0].mxu0
  %v1981 = vpop.f32.mrb[0].mxu0
  %v1982 = vadd.f32 %v1933, %v1981
  %v1983 = vpop.f32.mrb[0].mxu0
  %1984 = vmatprep.mubr.bf16.mxu0 %v1203
  %1985 = vmatmul.mubr.bf16.gmra.mrb[0].mxu0 %v1200
  %v1986 = vpop.f32.mrb[0].mxu0
  %v1987 = vadd.f32 %v1938, %v1986
  %v1988 = vpop.f32.mrb[0].mxu0
  %v1989 = vpop.f32.mrb[0].mxu0
  %v1990 = vadd.f32 %v1941, %v1989
  %v1991 = vpop.f32.mrb[0].mxu0
  %1992 = vdwg.mxu0
  %1993 = vmatprep.subr.bf16.mxu0 0
  %1994 = vmatpush1.bf16.msra.mxu0 %v1783
  %1995 = vmatprep.subr.bf16.mxu0 0
  %1996 = vmatpush1.bf16.msra.mxu0 %v1784
  %1997 = vmatprep.subr.bf16.mxu0 0
  %1998 = vmatpush1.bf16.msra.mxu0 %v1785
  %1999 = vmatprep.subr.bf16.mxu0 0
  %2000 = vmatpush1.bf16.msra.mxu0 %v1786
  %2001 = vmatprep.subr.bf16.mxu0 0
  %2002 = vmatpush1.bf16.msra.mxu0 %v1787
  %2003 = vmatprep.subr.bf16.mxu0 0
  %2004 = vmatpush1.bf16.msra.mxu0 %v1788
  %2005 = vmatprep.subr.bf16.mxu0 0
  %2006 = vmatpush1.bf16.msra.mxu0 %v1789
  %2007 = vmatprep.subr.bf16.mxu0 0
  %2008 = vmatpush1.bf16.msra.mxu0 %v1790
  %2009 = vmatprep.subr.bf16.mxu0 0
  %2010 = vmatpush1.bf16.msra.mxu0 %v1791
  %2011 = vmatprep.subr.bf16.mxu0 0
  %2012 = vmatpush1.bf16.msra.mxu0 %v1792
  %2013 = vmatprep.subr.bf16.mxu0 0
  %2014 = vmatpush1.bf16.msra.mxu0 %v1793
  %2015 = vmatprep.subr.bf16.mxu0 0
  %2016 = vmatpush1.bf16.msra.mxu0 %v1794
  %2017 = vmatprep.subr.bf16.mxu0 0
  %2018 = vmatpush1.bf16.msra.mxu0 %v1795
  %2019 = vmatprep.subr.bf16.mxu0 0
  %2020 = vmatpush1.bf16.msra.mxu0 %v1796
  %2021 = vmatprep.subr.bf16.mxu0 0
  %2022 = vmatpush1.bf16.msra.mxu0 %v1797
  %2023 = vmatprep.subr.bf16.mxu0 0
  %2024 = vmatpush1.bf16.msra.mxu0 %v1798
  %2025 = vmatprep.mubr.bf16.mxu0 %v1084
  %2026 = vmatmul.mubr.bf16.gmra.mrb[0].mxu0 %v1078
  %v2027 = vpop.f32.mrb[0].mxu0
  %v2028 = vadd.f32 %v1979, %v2027
  %v2029 = vpop.f32.mrb[0].mxu0
  %v2030 = vpop.f32.mrb[0].mxu0
  %v2031 = vadd.f32 %v1982, %v2030
  %v2032 = vpop.f32.mrb[0].mxu0
  %2033 = vmatprep.mubr.bf16.mxu0 %v1209
  %2034 = vmatmul.mubr.bf16.gmra.mrb[0].mxu0 %v1206
  %v2035 = vpop.f32.mrb[0].mxu0
  %v2036 = vadd.f32 %v1987, %v2035
  %v2037 = vpop.f32.mrb[0].mxu0
  %v2038 = vpop.f32.mrb[0].mxu0
  %v2039 = vadd.f32 %v1990, %v2038
  %v2040 = vpop.f32.mrb[0].mxu0
  %2041 = vdwg.mxu0
  %2042 = vmatprep.subr.bf16.mxu0 0
  %2043 = vmatpush1.bf16.msra.mxu0 %v1799
  %2044 = vmatprep.subr.bf16.mxu0 0
  %2045 = vmatpush1.bf16.msra.mxu0 %v1800
  %2046 = vmatprep.subr.bf16.mxu0 0
  %2047 = vmatpush1.bf16.msra.mxu0 %v1801
  %2048 = vmatprep.subr.bf16.mxu0 0
  %2049 = vmatpush1.bf16.msra.mxu0 %v1802
  %2050 = vmatprep.subr.bf16.mxu0 0
  %2051 = vmatpush1.bf16.msra.mxu0 %v1803
  %2052 = vmatprep.subr.bf16.mxu0 0
  %2053 = vmatpush1.bf16.msra.mxu0 %v1804
  %2054 = vmatprep.subr.bf16.mxu0 0
  %2055 = vmatpush1.bf16.msra.mxu0 %v1805
  %2056 = vmatprep.subr.bf16.mxu0 0
  %2057 = vmatpush1.bf16.msra.mxu0 %v1806
  %2058 = vmatprep.subr.bf16.mxu0 0
  %2059 = vmatpush1.bf16.msra.mxu0 %v1807
  %2060 = vmatprep.subr.bf16.mxu0 0
  %2061 = vmatpush1.bf16.msra.mxu0 %v1808
  %2062 = vmatprep.subr.bf16.mxu0 0
  %2063 = vmatpush1.bf16.msra.mxu0 %v1809
  %2064 = vmatprep.subr.bf16.mxu0 0
  %2065 = vmatpush1.bf16.msra.mxu0 %v1810
  %2066 = vmatprep.subr.bf16.mxu0 0
  %2067 = vmatpush1.bf16.msra.mxu0 %v1811
  %2068 = vmatprep.subr.bf16.mxu0 0
  %2069 = vmatpush1.bf16.msra.mxu0 %v1812
  %2070 = vmatprep.subr.bf16.mxu0 0
  %2071 = vmatpush1.bf16.msra.mxu0 %v1813
  %2072 = vmatprep.subr.bf16.mxu0 0
  %2073 = vmatpush1.bf16.msra.mxu0 %v1814
  %2074 = vmatprep.mubr.bf16.mxu0 %v1099
  %2075 = vmatmul.mubr.bf16.gmra.mrb[0].mxu0 %v1089
  %v2076 = vpop.f32.mrb[0].mxu0
  %v2077 = vadd.f32 %v2028, %v2076
  %v2078 = vpop.f32.mrb[0].mxu0
  %v2079 = vpop.f32.mrb[0].mxu0
  %v2080 = vadd.f32 %v2031, %v2079
  %v2081 = vpop.f32.mrb[0].mxu0
  %2082 = vmatprep.mubr.bf16.mxu0 %v1215
  %2083 = vmatmul.mubr.bf16.gmra.mrb[0].mxu0 %v1212
  %v2084 = vpop.f32.mrb[0].mxu0
  %v2085 = vadd.f32 %v2036, %v2084
  %v2086 = vpop.f32.mrb[0].mxu0
  %v2087 = vpop.f32.mrb[0].mxu0
  %v2088 = vadd.f32 %v2039, %v2087
  %v2089 = vpop.f32.mrb[0].mxu0
  %2090 = vdwg.mxu0
  %2091 = vmatprep.subr.bf16.mxu0 0
  %2092 = vmatpush1.bf16.msra.mxu0 %v1815
  %2093 = vmatprep.subr.bf16.mxu0 0
  %2094 = vmatpush1.bf16.msra.mxu0 %v1816
  %2095 = vmatprep.subr.bf16.mxu0 0
  %2096 = vmatpush1.bf16.msra.mxu0 %v1817
  %2097 = vmatprep.subr.bf16.mxu0 0
  %2098 = vmatpush1.bf16.msra.mxu0 %v1818
  %2099 = vmatprep.subr.bf16.mxu0 0
  %2100 = vmatpush1.bf16.msra.mxu0 %v1819
  %2101 = vmatprep.subr.bf16.mxu0 0
  %2102 = vmatpush1.bf16.msra.mxu0 %v1820
  %2103 = vmatprep.subr.bf16.mxu0 0
  %2104 = vmatpush1.bf16.msra.mxu0 %v1821
  %2105 = vmatprep.subr.bf16.mxu0 0
  %2106 = vmatpush1.bf16.msra.mxu0 %v1822
  %2107 = vmatprep.subr.bf16.mxu0 0
  %2108 = vmatpush1.bf16.msra.mxu0 0
  %2109 = vmatprep.subr.bf16.mxu0 0
  %2110 = vmatpush1.bf16.msra.mxu0 0
  %2111 = vmatprep.subr.bf16.mxu0 0
  %2112 = vmatpush1.bf16.msra.mxu0 0
  %2113 = vmatprep.subr.bf16.mxu0 0
  %2114 = vmatpush1.bf16.msra.mxu0 0
  %2115 = vmatprep.subr.bf16.mxu0 0
  %2116 = vmatpush1.bf16.msra.mxu0 0
  %2117 = vmatprep.subr.bf16.mxu0 0
  %2118 = vmatpush1.bf16.msra.mxu0 0
  %2119 = vmatprep.subr.bf16.mxu0 0
  %2120 = vmatpush1.bf16.msra.mxu0 0
  %2121 = vmatprep.subr.bf16.mxu0 0
  %2122 = vmatpush1.bf16.msra.mxu0 0
  %2123 = vmatprep.mubr.bf16.mxu0 0
  %2124 = vmatmul.mubr.bf16.gmra.mrb[0].mxu0 %v1105
  %v2125 = vpop.f32.mrb[0].mxu0
  %v2126 = vadd.f32 %v2077, %v2125
  %v2127 = vpop.f32.mrb[0].mxu0
  %v2128 = vpop.f32.mrb[0].mxu0
  %v2129 = vadd.f32 %v2080, %v2128
  %v2130 = vpop.f32.mrb[0].mxu0
  %2131 = vmatprep.mubr.bf16.mxu0 0
  %2132 = vmatmul.mubr.bf16.gmra.mrb[0].mxu0 %v1218
  %v2133 = vpop.f32.mrb[0].mxu0
  %v2134 = vadd.f32 %v2085, %v2133
  %v2135 = vpop.f32.mrb[0].mxu0
  %v2136 = vpop.f32.mrb[0].mxu0
  %v2137 = vadd.f32 %v2088, %v2136
  %v2138 = vpop.f32.mrb[0].mxu0
  %2139 = vdwg.mxu0
  %v2140 = vmax.f32 %v2126, 0.0
  %v2141 = vmax.f32 %v2129, 0.0
  %v2142 = vmax.f32 %v2134, 0.0
  %v2143 = vmax.f32 %v2137, 0.0
  %2144 = vst [vmem:[%s4] sm:$0xff] %v2140
  %2145 = vst [vmem:[%s4 + $0x8] sm:$0xff] %v2141
  %s2146 = scalar_lea.vmem %s4, 16
  %2147 = vst [vmem:[%s2146] sm:$0xff] %v2142
  %2148 = vst [vmem:[%s2146 + $0x8] sm:$0xff] %v2143
  // Predicated region
  $region18: #{basic_block_forward.1} parent=0 // pred_check
    _
  $region19: #{basic_block_forward.1} parent=0 // pred_check_branch
    %2150 = sbr.rel (0) target = $region21
  $region20: #{basic_block_forward.1} parent=0 // pred_region
    _
  $region21: #{basic_block_forward.1} parent=0 // pred_fallthru
    _
  // Predicated region
  $region22: #{basic_block_forward.1} parent=0 // pred_check
    _
  $region23: #{basic_block_forward.1} parent=0 // pred_check_branch
    %2152 = sbr.rel (0) target = $region25
  $region24: #{basic_block_forward.1} parent=0 // pred_region
    _
  $region25: #{basic_block_forward.1} parent=0 // pred_fallthru
    _

</llo_original>
